<compile_context>
chip_gen: v7x
topology: tpu7x:2x2x1
jax: 0.10.0
libtpu: 0.0.40
codegen_flags: <defaults>
</compile_context>

<pallas_src>
import functools

import jax
import jax.numpy as jnp
from jax import lax
from jax.experimental import pallas as pl
from jax.experimental.pallas import tpu as pltpu

DROP_IN = 0.8    # 1 - drop['in'][1]    (eval mode -> constant mask)
DROP_REC = 0.8   # 1 - drop['recur'][1]
DROP_ORIG = 0.8  # 1 - drop['orig'][1]


def _round_up(x, m):
    return (x + m - 1) // m * m


def _ligru_kernel(x_ref, whz_ref, bhz_ref, uhz_ref, out_ref,
                  wx_scr, h_scr, *, Tc, bt, D, Hp):
    t = pl.program_id(1)

    @pl.when(t == 0)
    def _():
        h_scr[...] = jnp.zeros_like(h_scr)      # h_init = zeros per batch tile

    # ---- feed-forward projection for the whole chunk: one big GEMM ----
    # (Tc*bt, D) @ (D, 2*Hp); [Wh|Wz] fused, dropout/BN-scale pre-folded into
    # the weights, BN shift added once per chunk.
    xk = x_ref[...].reshape(Tc * bt, D)
    wx = jnp.dot(xk, whz_ref[...], preferred_element_type=jnp.float32)
    wx_scr[...] = wx + bhz_ref[...]

    uhz = uhz_ref[...]                          # (Hp, 2*Hp), hoisted load

    def step(k, ht):
        row = pl.multiple_of(k * bt, bt)
        g = wx_scr[pl.ds(row, bt), :] + jnp.dot(
            ht, uhz, preferred_element_type=jnp.float32)       # (bt, 2*Hp)
        hcand = jnp.maximum(g[:, :Hp], 0.0)     # relu(at); DROP_ORIG pre-folded
        zt = jax.nn.sigmoid(g[:, Hp:])
        ht_new = zt * ht + (1.0 - zt) * hcand
        out_ref[k] = ht_new.astype(out_ref.dtype)
        return ht_new

    h_scr[...] = lax.fori_loop(0, Tc, step, h_scr[...], unroll=min(Tc, 8))


def ligru_pallas(x, whT, wzT, uhT, uzT, sh, bh, sz, bz,
                 *, time_chunk=64, batch_tile=None):
    """Single-layer liGRU forward (eval mode).

    x: (T, B, D) time-major. whT/wzT: (D, H), uhT/uzT: (H, H) (pre-transposed
    so the kernel does x @ W). sh/bh/sz/bz: folded BatchNorm1d eval affine,
    shape (1, H). Returns (T, B, H) float32.
    """
    T, B, D = x.shape
    H = whT.shape[1]

    # ---- fold eval-mode dropout constants and BN scale into the weights ----
    # hcand = relu(at) * DROP_ORIG == relu(DROP_ORIG * at) since DROP_ORIG > 0,
    # so DROP_ORIG is folded through the whole h-gate pre-activation.
    wh_eff = whT * (sh * (DROP_IN * DROP_ORIG))   # (D, H)
    wz_eff = wzT * (sz * DROP_IN)
    bh_eff = bh * DROP_ORIG                       # (1, H)
    bz_eff = bz
    uh_eff = uhT * (DROP_REC * DROP_ORIG)         # (H, H)
    uz_eff = uzT * DROP_REC

    # ---- pad to TPU-friendly shapes ----
    Hp = _round_up(H, 128)        # lane-dense gate width / output
    Bp = _round_up(B, 8)          # sublane-aligned batch
    Tc = max(1, min(time_chunk, T))
    Tp = _round_up(T, Tc)
    bt = Bp if batch_tile is None else batch_tile
    assert Bp % bt == 0 and bt % 8 == 0

    f32 = jnp.float32
    # fused, zero-padded weights: [h-gate | z-gate] along the 2*Hp axis.
    whz = jnp.zeros((D, 2 * Hp), f32)
    whz = whz.at[:, :H].set(wh_eff).at[:, Hp:Hp + H].set(wz_eff)
    bhz = jnp.zeros((1, 2 * Hp), f32)
    bhz = bhz.at[:, :H].set(bh_eff).at[:, Hp:Hp + H].set(bz_eff)
    uhz = jnp.zeros((Hp, 2 * Hp), f32)
    uhz = uhz.at[:H, :H].set(uh_eff).at[:H, Hp:Hp + H].set(uz_eff)

    xp = jnp.zeros((Tp, Bp, D), f32).at[:T, :B, :].set(x.astype(f32))

    grid = (Bp // bt, Tp // Tc)
    kernel = functools.partial(_ligru_kernel, Tc=Tc, bt=bt, D=D, Hp=Hp)

    out = pl.pallas_call(
        kernel,
        out_shape=jax.ShapeDtypeStruct((Tp, Bp, Hp), f32),
        grid_spec=pltpu.PrefetchScalarGridSpec(
            num_scalar_prefetch=0,
            grid=grid,
            in_specs=[
                pl.BlockSpec((Tc, bt, D), lambda b, t: (t, b, 0)),   # x chunk
                pl.BlockSpec((D, 2 * Hp), lambda b, t: (0, 0)),      # [Wh|Wz]
                pl.BlockSpec((1, 2 * Hp), lambda b, t: (0, 0)),      # [bh|bz]
                pl.BlockSpec((Hp, 2 * Hp), lambda b, t: (0, 0)),     # [Uh|Uz]
            ],
            out_specs=pl.BlockSpec((Tc, bt, Hp), lambda b, t: (t, b, 0)),
            scratch_shapes=[
                pltpu.VMEM((Tc * bt, 2 * Hp), f32),   # chunk projection Wx
                pltpu.VMEM((bt, Hp), f32),            # carried hidden state
            ],
        ),
        compiler_params=pltpu.CompilerParams(
            dimension_semantics=("parallel", "arbitrary"),  # batch || , time seq
            vmem_limit_bytes=64 * 1024 * 1024,
        ),
    )(xp, whz, bhz, uhz)

    return out[:T, :B, :H]


def ligru_reference(x, whT, wzT, uhT, uzT, sh, bh, sz, bz):
    """Pure-JAX reference mirroring the PyTorch forward (eval mode), unfolded."""
    T, B, _ = x.shape
    H = whT.shape[1]
    hi = jax.lax.Precision.HIGHEST
    xm = x * DROP_IN
    wh_out = jnp.einsum("tbd,dh->tbh", xm, whT, precision=hi) * sh + bh
    wz_out = jnp.einsum("tbd,dh->tbh", xm, wzT, precision=hi) * sz + bz
    ht = jnp.zeros((B, H), jnp.float32)
    hs = []
    for k in range(T):
        zt = jax.nn.sigmoid(wz_out[k] + jnp.dot(ht * DROP_REC, uzT, precision=hi))
        at = wh_out[k] + jnp.dot(ht * DROP_REC, uhT, precision=hi)
        hcand = jnp.maximum(at, 0.0) * DROP_ORIG
        ht = zt * ht + (1.0 - zt) * hcand
        hs.append(ht)
    return jnp.stack(hs)


def make_params(key, inp_dim, units):
    """Deterministic parameter init mirroring the module's __init__."""
    k1, k2, k3, k4, k5, k6 = jax.random.split(key, 6)
    bound = 1.0 / jnp.sqrt(inp_dim)
    # nn.Linear(inp_dim, units, bias=False): weight (units, inp_dim), U(-b, b)
    wh = jax.random.uniform(k1, (units, inp_dim), jnp.float32, -bound, bound)
    wz = jax.random.uniform(k2, (units, inp_dim), jnp.float32, -bound, bound)
    # orthogonal init for the recurrent weights (units, units)
    uh, _ = jnp.linalg.qr(jax.random.normal(k3, (units, units), jnp.float32))
    uz, _ = jnp.linalg.qr(jax.random.normal(k4, (units, units), jnp.float32))
    # BatchNorm1d(units) eval-mode affine; non-trivial but deterministic
    eps = 1e-5
    gamma_h = 1.0 + 0.1 * jax.random.normal(k5, (units,), jnp.float32)
    beta_h = 0.05 * jnp.arange(units, dtype=jnp.float32) / units
    mean_h = jnp.zeros((units,), jnp.float32)
    var_h = jnp.ones((units,), jnp.float32)
    gamma_z = 1.0 + 0.1 * jax.random.normal(k6, (units,), jnp.float32)
    beta_z = -0.05 * jnp.arange(units, dtype=jnp.float32) / units
    mean_z = jnp.zeros((units,), jnp.float32)
    var_z = jnp.ones((units,), jnp.float32)

    sh = (gamma_h / jnp.sqrt(var_h + eps)).reshape(1, units)
    bh = (beta_h - mean_h * gamma_h / jnp.sqrt(var_h + eps)).reshape(1, units)
    sz = (gamma_z / jnp.sqrt(var_z + eps)).reshape(1, units)
    bz = (beta_z - mean_z * gamma_z / jnp.sqrt(var_z + eps)).reshape(1, units)

    # pass transposed (in, out) so kernels do x @ W
    return wh.T, wz.T, uh.T, uz.T, sh, bh, sz, bz


if __name__ == "__main__":
    T, B, D, H = 8, 8, 16, 32   # (seq, batch, inp_dim), units
    key = jax.random.PRNGKey(0)
    kx, kp = jax.random.split(key)
    x = jax.random.normal(kx, (T, B, D), jnp.float32)
    params = make_params(kp, D, H)

    out = ligru_pallas(x, *params)
    out = jax.block_until_ready(out)

    ref = ligru_reference(x, *params)
    assert out.shape == (T, B, H)
    assert jnp.allclose(out, ref, atol=1e-4, rtol=1e-4), "mismatch vs reference"

    print("KERNEL_OK")
</pallas_src>

<mosaic_0001>
module attributes {stable_mosaic.version = 11 : i64} {
  func.func @_ligru_kernel(%arg0: i32, %arg1: i32, %arg2: memref<8x8x16xf32, #tpu.memory_space<vmem>>, %arg3: memref<16x256xf32, #tpu.memory_space<vmem>>, %arg4: memref<1x256xf32, #tpu.memory_space<vmem>>, %arg5: memref<128x256xf32, #tpu.memory_space<vmem>>, %arg6: memref<8x8x128xf32, #tpu.memory_space<vmem>>, %arg7: memref<64x256xf32, #tpu.memory_space<vmem>>, %arg8: memref<8x128xf32, #tpu.memory_space<vmem>>) attributes {dimension_semantics = [#tpu.dimension_semantics<parallel>, #tpu.dimension_semantics<arbitrary>], iteration_bounds = array<i64: 1, 1>, scalar_prefetch = 0 : i64, scratch_operands = 2 : i64, tpu.core_type = #tpu.core_type<tc>, window_params = [{transform_indices = @transform_0, window_bounds = array<i64: 8, 8, 16>}, {pipeline_mode = #tpu.pipeline_mode<synchronous>, transform_indices = @transform_1, window_bounds = array<i64: 16, 256>}, {pipeline_mode = #tpu.pipeline_mode<synchronous>, transform_indices = @transform_2, window_bounds = array<i64: 1, 256>}, {pipeline_mode = #tpu.pipeline_mode<synchronous>, transform_indices = @transform_3, window_bounds = array<i64: 128, 256>}, {transform_indices = @transform_4, window_bounds = array<i64: 8, 8, 128>}]} {
    %c0_i32 = arith.constant 0 : i32
    %0 = arith.cmpi eq, %arg1, %c0_i32 : i32
    %1 = arith.extui %0 : i1 to i32
    %c0_i32_0 = arith.constant 0 : i32
    %2 = arith.cmpi ne, %1, %c0_i32_0 : i32
    scf.if %2 {
      %cst_80 = arith.constant 0.000000e+00 : f32
      %206 = vector.broadcast %cst_80 : f32 to vector<8x128xf32>
      %c0_81 = arith.constant 0 : index
      %c0_82 = arith.constant 0 : index
      %207 = vector.load %arg8[%c0_81, %c0_82] : memref<8x128xf32, #tpu.memory_space<vmem>>, vector<8x128xf32>
      tpu.vector_store %arg8[%c0_81, %c0_82], %206 {strides = array<i32>} : memref<8x128xf32, #tpu.memory_space<vmem>>, vector<8x128xf32>,
    } else {
    }
    %c0 = arith.constant 0 : index
    %c0_1 = arith.constant 0 : index
    %c0_2 = arith.constant 0 : index
    %3 = vector.load %arg2[%c0, %c0_1, %c0_2] : memref<8x8x16xf32, #tpu.memory_space<vmem>>, vector<8x8x16xf32>
    %4 = vector.shape_cast %3 : vector<8x8x16xf32> to vector<64x16xf32>
    %c0_3 = arith.constant 0 : index
    %c0_4 = arith.constant 0 : index
    %5 = vector.load %arg3[%c0_3, %c0_4] : memref<16x256xf32, #tpu.memory_space<vmem>>, vector<16x256xf32>
    %cst = arith.constant dense<0.000000e+00> : vector<64x256xf32>
    %6 = tpu.matmul %4, %5, %cst {dimension_numbers = #tpu.dot_dimension_numbers<[1], [0], [0], [1], [0, 0, 1, 1], [], []>} : vector<64x16xf32>, vector<16x256xf32>, vector<64x256xf32> -> vector<64x256xf32>
    %c0_5 = arith.constant 0 : index
    %c0_6 = arith.constant 0 : index
    %7 = vector.load %arg4[%c0_5, %c0_6] : memref<1x256xf32, #tpu.memory_space<vmem>>, vector<1x256xf32>
    %8 = vector.broadcast %7 : vector<1x256xf32> to vector<64x256xf32>
    %9 = arith.addf %6, %8 : vector<64x256xf32>
    %c0_7 = arith.constant 0 : index
    %c0_8 = arith.constant 0 : index
    %10 = vector.load %arg7[%c0_7, %c0_8] : memref<64x256xf32, #tpu.memory_space<vmem>>, vector<64x256xf32>
    tpu.vector_store %arg7[%c0_7, %c0_8], %9 {strides = array<i32>} : memref<64x256xf32, #tpu.memory_space<vmem>>, vector<64x256xf32>,
    %c0_9 = arith.constant 0 : index
    %c0_10 = arith.constant 0 : index
    %11 = vector.load %arg5[%c0_9, %c0_10] : memref<128x256xf32, #tpu.memory_space<vmem>>, vector<128x256xf32>
    %c0_11 = arith.constant 0 : index
    %c0_12 = arith.constant 0 : index
    %12 = vector.load %arg8[%c0_11, %c0_12] : memref<8x128xf32, #tpu.memory_space<vmem>>, vector<8x128xf32>
    %c0_i32_13 = arith.constant 0 : i32
    %c8_i32 = arith.constant 8 : i32
    %13 = arith.muli %c0_i32_13, %c8_i32 : i32
    %14 = tpu.assume_multiple %13, 8 : i32
    %15 = arith.index_cast %14 : i32 to index
    %c0_14 = arith.constant 0 : index
    %16 = vector.load %arg7[%15, %c0_14] : memref<64x256xf32, #tpu.memory_space<vmem>>, vector<8x256xf32>
    %cst_15 = arith.constant dense<0.000000e+00> : vector<8x256xf32>
    %17 = tpu.matmul %12, %11, %cst_15 {dimension_numbers = #tpu.dot_dimension_numbers<[1], [0], [0], [1], [0, 0, 1, 1], [], []>} : vector<8x128xf32>, vector<128x256xf32>, vector<8x256xf32> -> vector<8x256xf32>
    %18 = arith.addf %16, %17 : vector<8x256xf32>
    %19 = vector.extract_strided_slice %18 {offsets = [0, 0], sizes = [8, 128], strides = [1, 1]} : vector<8x256xf32> to vector<8x128xf32>
    %cst_16 = arith.constant 0.000000e+00 : f32
    %20 = vector.broadcast %cst_16 : f32 to vector<8x128xf32>
    %21 = arith.maximumf %19, %20 : vector<8x128xf32>
    %22 = vector.extract_strided_slice %18 {offsets = [0, 128], sizes = [8, 128], strides = [1, 1]} : vector<8x256xf32> to vector<8x128xf32>
    %23 = arith.negf %22 : vector<8x128xf32>
    %24 = math.exp %23 : vector<8x128xf32>
    %cst_17 = arith.constant 1.000000e+00 : f32
    %25 = vector.broadcast %cst_17 : f32 to vector<8x128xf32>
    %26 = arith.addf %25, %24 : vector<8x128xf32>
    %27 = arith.divf %25, %26 : vector<8x128xf32>
    %28 = arith.mulf %27, %12 : vector<8x128xf32>
    %cst_18 = arith.constant 1.000000e+00 : f32
    %29 = vector.broadcast %cst_18 : f32 to vector<8x128xf32>
    %30 = arith.subf %29, %27 : vector<8x128xf32>
    %31 = arith.mulf %30, %21 : vector<8x128xf32>
    %32 = arith.addf %28, %31 : vector<8x128xf32>
    %33 = arith.index_cast %c0_i32_13 : i32 to index
    %c0_19 = arith.constant 0 : index
    %c0_20 = arith.constant 0 : index
    %34 = vector.load %arg6[%33, %c0_19, %c0_20] : memref<8x8x128xf32, #tpu.memory_space<vmem>>, vector<1x8x128xf32>
    %35 = vector.shape_cast %34 : vector<1x8x128xf32> to vector<8x128xf32>
    %36 = vector.shape_cast %32 : vector<8x128xf32> to vector<1x8x128xf32>
    tpu.vector_store %arg6[%33, %c0_19, %c0_20], %36 {strides = array<i32>} : memref<8x8x128xf32, #tpu.memory_space<vmem>>, vector<1x8x128xf32>,
    %c1_i32 = arith.constant 1 : i32
    %c8_i32_21 = arith.constant 8 : i32
    %37 = arith.muli %c1_i32, %c8_i32_21 : i32
    %38 = tpu.assume_multiple %37, 8 : i32
    %39 = arith.index_cast %38 : i32 to index
    %c0_22 = arith.constant 0 : index
    %40 = vector.load %arg7[%39, %c0_22] : memref<64x256xf32, #tpu.memory_space<vmem>>, vector<8x256xf32>
    %cst_23 = arith.constant dense<0.000000e+00> : vector<8x256xf32>
    %41 = tpu.matmul %32, %11, %cst_23 {dimension_numbers = #tpu.dot_dimension_numbers<[1], [0], [0], [1], [0, 0, 1, 1], [], []>} : vector<8x128xf32>, vector<128x256xf32>, vector<8x256xf32> -> vector<8x256xf32>
    %42 = arith.addf %40, %41 : vector<8x256xf32>
    %43 = vector.extract_strided_slice %42 {offsets = [0, 0], sizes = [8, 128], strides = [1, 1]} : vector<8x256xf32> to vector<8x128xf32>
    %cst_24 = arith.constant 0.000000e+00 : f32
    %44 = vector.broadcast %cst_24 : f32 to vector<8x128xf32>
    %45 = arith.maximumf %43, %44 : vector<8x128xf32>
    %46 = vector.extract_strided_slice %42 {offsets = [0, 128], sizes = [8, 128], strides = [1, 1]} : vector<8x256xf32> to vector<8x128xf32>
    %47 = arith.negf %46 : vector<8x128xf32>
    %48 = math.exp %47 : vector<8x128xf32>
    %cst_25 = arith.constant 1.000000e+00 : f32
    %49 = vector.broadcast %cst_25 : f32 to vector<8x128xf32>
    %50 = arith.addf %49, %48 : vector<8x128xf32>
    %51 = arith.divf %49, %50 : vector<8x128xf32>
    %52 = arith.mulf %51, %32 : vector<8x128xf32>
    %cst_26 = arith.constant 1.000000e+00 : f32
    %53 = vector.broadcast %cst_26 : f32 to vector<8x128xf32>
    %54 = arith.subf %53, %51 : vector<8x128xf32>
    %55 = arith.mulf %54, %45 : vector<8x128xf32>
    %56 = arith.addf %52, %55 : vector<8x128xf32>
    %57 = arith.index_cast %c1_i32 : i32 to index
    %c0_27 = arith.constant 0 : index
    %c0_28 = arith.constant 0 : index
    %58 = vector.load %arg6[%57, %c0_27, %c0_28] : memref<8x8x128xf32, #tpu.memory_space<vmem>>, vector<1x8x128xf32>
    %59 = vector.shape_cast %58 : vector<1x8x128xf32> to vector<8x128xf32>
    %60 = vector.shape_cast %56 : vector<8x128xf32> to vector<1x8x128xf32>
    tpu.vector_store %arg6[%57, %c0_27, %c0_28], %60 {strides = array<i32>} : memref<8x8x128xf32, #tpu.memory_space<vmem>>, vector<1x8x128xf32>,
    %c2_i32 = arith.constant 2 : i32
    %c8_i32_29 = arith.constant 8 : i32
    %61 = arith.muli %c2_i32, %c8_i32_29 : i32
    %62 = tpu.assume_multiple %61, 8 : i32
    %63 = arith.index_cast %62 : i32 to index
    %c0_30 = arith.constant 0 : index
    %64 = vector.load %arg7[%63, %c0_30] : memref<64x256xf32, #tpu.memory_space<vmem>>, vector<8x256xf32>
    %cst_31 = arith.constant dense<0.000000e+00> : vector<8x256xf32>
    %65 = tpu.matmul %56, %11, %cst_31 {dimension_numbers = #tpu.dot_dimension_numbers<[1], [0], [0], [1], [0, 0, 1, 1], [], []>} : vector<8x128xf32>, vector<128x256xf32>, vector<8x256xf32> -> vector<8x256xf32>
    %66 = arith.addf %64, %65 : vector<8x256xf32>
    %67 = vector.extract_strided_slice %66 {offsets = [0, 0], sizes = [8, 128], strides = [1, 1]} : vector<8x256xf32> to vector<8x128xf32>
    %cst_32 = arith.constant 0.000000e+00 : f32
    %68 = vector.broadcast %cst_32 : f32 to vector<8x128xf32>
    %69 = arith.maximumf %67, %68 : vector<8x128xf32>
    %70 = vector.extract_strided_slice %66 {offsets = [0, 128], sizes = [8, 128], strides = [1, 1]} : vector<8x256xf32> to vector<8x128xf32>
    %71 = arith.negf %70 : vector<8x128xf32>
    %72 = math.exp %71 : vector<8x128xf32>
    %cst_33 = arith.constant 1.000000e+00 : f32
    %73 = vector.broadcast %cst_33 : f32 to vector<8x128xf32>
    %74 = arith.addf %73, %72 : vector<8x128xf32>
    %75 = arith.divf %73, %74 : vector<8x128xf32>
    %76 = arith.mulf %75, %56 : vector<8x128xf32>
    %cst_34 = arith.constant 1.000000e+00 : f32
    %77 = vector.broadcast %cst_34 : f32 to vector<8x128xf32>
    %78 = arith.subf %77, %75 : vector<8x128xf32>
    %79 = arith.mulf %78, %69 : vector<8x128xf32>
    %80 = arith.addf %76, %79 : vector<8x128xf32>
    %81 = arith.index_cast %c2_i32 : i32 to index
    %c0_35 = arith.constant 0 : index
    %c0_36 = arith.constant 0 : index
    %82 = vector.load %arg6[%81, %c0_35, %c0_36] : memref<8x8x128xf32, #tpu.memory_space<vmem>>, vector<1x8x128xf32>
    %83 = vector.shape_cast %82 : vector<1x8x128xf32> to vector<8x128xf32>
    %84 = vector.shape_cast %80 : vector<8x128xf32> to vector<1x8x128xf32>
    tpu.vector_store %arg6[%81, %c0_35, %c0_36], %84 {strides = array<i32>} : memref<8x8x128xf32, #tpu.memory_space<vmem>>, vector<1x8x128xf32>,
    %c3_i32 = arith.constant 3 : i32
    %c8_i32_37 = arith.constant 8 : i32
    %85 = arith.muli %c3_i32, %c8_i32_37 : i32
    %86 = tpu.assume_multiple %85, 8 : i32
    %87 = arith.index_cast %86 : i32 to index
    %c0_38 = arith.constant 0 : index
    %88 = vector.load %arg7[%87, %c0_38] : memref<64x256xf32, #tpu.memory_space<vmem>>, vector<8x256xf32>
    %cst_39 = arith.constant dense<0.000000e+00> : vector<8x256xf32>
    %89 = tpu.matmul %80, %11, %cst_39 {dimension_numbers = #tpu.dot_dimension_numbers<[1], [0], [0], [1], [0, 0, 1, 1], [], []>} : vector<8x128xf32>, vector<128x256xf32>, vector<8x256xf32> -> vector<8x256xf32>
    %90 = arith.addf %88, %89 : vector<8x256xf32>
    %91 = vector.extract_strided_slice %90 {offsets = [0, 0], sizes = [8, 128], strides = [1, 1]} : vector<8x256xf32> to vector<8x128xf32>
    %cst_40 = arith.constant 0.000000e+00 : f32
    %92 = vector.broadcast %cst_40 : f32 to vector<8x128xf32>
    %93 = arith.maximumf %91, %92 : vector<8x128xf32>
    %94 = vector.extract_strided_slice %90 {offsets = [0, 128], sizes = [8, 128], strides = [1, 1]} : vector<8x256xf32> to vector<8x128xf32>
    %95 = arith.negf %94 : vector<8x128xf32>
    %96 = math.exp %95 : vector<8x128xf32>
    %cst_41 = arith.constant 1.000000e+00 : f32
    %97 = vector.broadcast %cst_41 : f32 to vector<8x128xf32>
    %98 = arith.addf %97, %96 : vector<8x128xf32>
    %99 = arith.divf %97, %98 : vector<8x128xf32>
    %100 = arith.mulf %99, %80 : vector<8x128xf32>
    %cst_42 = arith.constant 1.000000e+00 : f32
    %101 = vector.broadcast %cst_42 : f32 to vector<8x128xf32>
    %102 = arith.subf %101, %99 : vector<8x128xf32>
    %103 = arith.mulf %102, %93 : vector<8x128xf32>
    %104 = arith.addf %100, %103 : vector<8x128xf32>
    %105 = arith.index_cast %c3_i32 : i32 to index
    %c0_43 = arith.constant 0 : index
    %c0_44 = arith.constant 0 : index
    %106 = vector.load %arg6[%105, %c0_43, %c0_44] : memref<8x8x128xf32, #tpu.memory_space<vmem>>, vector<1x8x128xf32>
    %107 = vector.shape_cast %106 : vector<1x8x128xf32> to vector<8x128xf32>
    %108 = vector.shape_cast %104 : vector<8x128xf32> to vector<1x8x128xf32>
    tpu.vector_store %arg6[%105, %c0_43, %c0_44], %108 {strides = array<i32>} : memref<8x8x128xf32, #tpu.memory_space<vmem>>, vector<1x8x128xf32>,
    %c4_i32 = arith.constant 4 : i32
    %c8_i32_45 = arith.constant 8 : i32
    %109 = arith.muli %c4_i32, %c8_i32_45 : i32
    %110 = tpu.assume_multiple %109, 8 : i32
    %111 = arith.index_cast %110 : i32 to index
    %c0_46 = arith.constant 0 : index
    %112 = vector.load %arg7[%111, %c0_46] : memref<64x256xf32, #tpu.memory_space<vmem>>, vector<8x256xf32>
    %cst_47 = arith.constant dense<0.000000e+00> : vector<8x256xf32>
    %113 = tpu.matmul %104, %11, %cst_47 {dimension_numbers = #tpu.dot_dimension_numbers<[1], [0], [0], [1], [0, 0, 1, 1], [], []>} : vector<8x128xf32>, vector<128x256xf32>, vector<8x256xf32> -> vector<8x256xf32>
    %114 = arith.addf %112, %113 : vector<8x256xf32>
    %115 = vector.extract_strided_slice %114 {offsets = [0, 0], sizes = [8, 128], strides = [1, 1]} : vector<8x256xf32> to vector<8x128xf32>
    %cst_48 = arith.constant 0.000000e+00 : f32
    %116 = vector.broadcast %cst_48 : f32 to vector<8x128xf32>
    %117 = arith.maximumf %115, %116 : vector<8x128xf32>
    %118 = vector.extract_strided_slice %114 {offsets = [0, 128], sizes = [8, 128], strides = [1, 1]} : vector<8x256xf32> to vector<8x128xf32>
    %119 = arith.negf %118 : vector<8x128xf32>
    %120 = math.exp %119 : vector<8x128xf32>
    %cst_49 = arith.constant 1.000000e+00 : f32
    %121 = vector.broadcast %cst_49 : f32 to vector<8x128xf32>
    %122 = arith.addf %121, %120 : vector<8x128xf32>
    %123 = arith.divf %121, %122 : vector<8x128xf32>
    %124 = arith.mulf %123, %104 : vector<8x128xf32>
    %cst_50 = arith.constant 1.000000e+00 : f32
    %125 = vector.broadcast %cst_50 : f32 to vector<8x128xf32>
    %126 = arith.subf %125, %123 : vector<8x128xf32>
    %127 = arith.mulf %126, %117 : vector<8x128xf32>
    %128 = arith.addf %124, %127 : vector<8x128xf32>
    %129 = arith.index_cast %c4_i32 : i32 to index
    %c0_51 = arith.constant 0 : index
    %c0_52 = arith.constant 0 : index
    %130 = vector.load %arg6[%129, %c0_51, %c0_52] : memref<8x8x128xf32, #tpu.memory_space<vmem>>, vector<1x8x128xf32>
    %131 = vector.shape_cast %130 : vector<1x8x128xf32> to vector<8x128xf32>
    %132 = vector.shape_cast %128 : vector<8x128xf32> to vector<1x8x128xf32>
    tpu.vector_store %arg6[%129, %c0_51, %c0_52], %132 {strides = array<i32>} : memref<8x8x128xf32, #tpu.memory_space<vmem>>, vector<1x8x128xf32>,
    %c5_i32 = arith.constant 5 : i32
    %c8_i32_53 = arith.constant 8 : i32
    %133 = arith.muli %c5_i32, %c8_i32_53 : i32
    %134 = tpu.assume_multiple %133, 8 : i32
    %135 = arith.index_cast %134 : i32 to index
    %c0_54 = arith.constant 0 : index
    %136 = vector.load %arg7[%135, %c0_54] : memref<64x256xf32, #tpu.memory_space<vmem>>, vector<8x256xf32>
    %cst_55 = arith.constant dense<0.000000e+00> : vector<8x256xf32>
    %137 = tpu.matmul %128, %11, %cst_55 {dimension_numbers = #tpu.dot_dimension_numbers<[1], [0], [0], [1], [0, 0, 1, 1], [], []>} : vector<8x128xf32>, vector<128x256xf32>, vector<8x256xf32> -> vector<8x256xf32>
    %138 = arith.addf %136, %137 : vector<8x256xf32>
    %139 = vector.extract_strided_slice %138 {offsets = [0, 0], sizes = [8, 128], strides = [1, 1]} : vector<8x256xf32> to vector<8x128xf32>
    %cst_56 = arith.constant 0.000000e+00 : f32
    %140 = vector.broadcast %cst_56 : f32 to vector<8x128xf32>
    %141 = arith.maximumf %139, %140 : vector<8x128xf32>
    %142 = vector.extract_strided_slice %138 {offsets = [0, 128], sizes = [8, 128], strides = [1, 1]} : vector<8x256xf32> to vector<8x128xf32>
    %143 = arith.negf %142 : vector<8x128xf32>
    %144 = math.exp %143 : vector<8x128xf32>
    %cst_57 = arith.constant 1.000000e+00 : f32
    %145 = vector.broadcast %cst_57 : f32 to vector<8x128xf32>
    %146 = arith.addf %145, %144 : vector<8x128xf32>
    %147 = arith.divf %145, %146 : vector<8x128xf32>
    %148 = arith.mulf %147, %128 : vector<8x128xf32>
    %cst_58 = arith.constant 1.000000e+00 : f32
    %149 = vector.broadcast %cst_58 : f32 to vector<8x128xf32>
    %150 = arith.subf %149, %147 : vector<8x128xf32>
    %151 = arith.mulf %150, %141 : vector<8x128xf32>
    %152 = arith.addf %148, %151 : vector<8x128xf32>
    %153 = arith.index_cast %c5_i32 : i32 to index
    %c0_59 = arith.constant 0 : index
    %c0_60 = arith.constant 0 : index
    %154 = vector.load %arg6[%153, %c0_59, %c0_60] : memref<8x8x128xf32, #tpu.memory_space<vmem>>, vector<1x8x128xf32>
    %155 = vector.shape_cast %154 : vector<1x8x128xf32> to vector<8x128xf32>
    %156 = vector.shape_cast %152 : vector<8x128xf32> to vector<1x8x128xf32>
    tpu.vector_store %arg6[%153, %c0_59, %c0_60], %156 {strides = array<i32>} : memref<8x8x128xf32, #tpu.memory_space<vmem>>, vector<1x8x128xf32>,
    %c6_i32 = arith.constant 6 : i32
    %c8_i32_61 = arith.constant 8 : i32
    %157 = arith.muli %c6_i32, %c8_i32_61 : i32
    %158 = tpu.assume_multiple %157, 8 : i32
    %159 = arith.index_cast %158 : i32 to index
    %c0_62 = arith.constant 0 : index
    %160 = vector.load %arg7[%159, %c0_62] : memref<64x256xf32, #tpu.memory_space<vmem>>, vector<8x256xf32>
    %cst_63 = arith.constant dense<0.000000e+00> : vector<8x256xf32>
    %161 = tpu.matmul %152, %11, %cst_63 {dimension_numbers = #tpu.dot_dimension_numbers<[1], [0], [0], [1], [0, 0, 1, 1], [], []>} : vector<8x128xf32>, vector<128x256xf32>, vector<8x256xf32> -> vector<8x256xf32>
    %162 = arith.addf %160, %161 : vector<8x256xf32>
    %163 = vector.extract_strided_slice %162 {offsets = [0, 0], sizes = [8, 128], strides = [1, 1]} : vector<8x256xf32> to vector<8x128xf32>
    %cst_64 = arith.constant 0.000000e+00 : f32
    %164 = vector.broadcast %cst_64 : f32 to vector<8x128xf32>
    %165 = arith.maximumf %163, %164 : vector<8x128xf32>
    %166 = vector.extract_strided_slice %162 {offsets = [0, 128], sizes = [8, 128], strides = [1, 1]} : vector<8x256xf32> to vector<8x128xf32>
    %167 = arith.negf %166 : vector<8x128xf32>
    %168 = math.exp %167 : vector<8x128xf32>
    %cst_65 = arith.constant 1.000000e+00 : f32
    %169 = vector.broadcast %cst_65 : f32 to vector<8x128xf32>
    %170 = arith.addf %169, %168 : vector<8x128xf32>
    %171 = arith.divf %169, %170 : vector<8x128xf32>
    %172 = arith.mulf %171, %152 : vector<8x128xf32>
    %cst_66 = arith.constant 1.000000e+00 : f32
    %173 = vector.broadcast %cst_66 : f32 to vector<8x128xf32>
    %174 = arith.subf %173, %171 : vector<8x128xf32>
    %175 = arith.mulf %174, %165 : vector<8x128xf32>
    %176 = arith.addf %172, %175 : vector<8x128xf32>
    %177 = arith.index_cast %c6_i32 : i32 to index
    %c0_67 = arith.constant 0 : index
    %c0_68 = arith.constant 0 : index
    %178 = vector.load %arg6[%177, %c0_67, %c0_68] : memref<8x8x128xf32, #tpu.memory_space<vmem>>, vector<1x8x128xf32>
    %179 = vector.shape_cast %178 : vector<1x8x128xf32> to vector<8x128xf32>
    %180 = vector.shape_cast %176 : vector<8x128xf32> to vector<1x8x128xf32>
    tpu.vector_store %arg6[%177, %c0_67, %c0_68], %180 {strides = array<i32>} : memref<8x8x128xf32, #tpu.memory_space<vmem>>, vector<1x8x128xf32>,
    %c7_i32 = arith.constant 7 : i32
    %c8_i32_69 = arith.constant 8 : i32
    %181 = arith.muli %c7_i32, %c8_i32_69 : i32
    %182 = tpu.assume_multiple %181, 8 : i32
    %183 = arith.index_cast %182 : i32 to index
    %c0_70 = arith.constant 0 : index
    %184 = vector.load %arg7[%183, %c0_70] : memref<64x256xf32, #tpu.memory_space<vmem>>, vector<8x256xf32>
    %cst_71 = arith.constant dense<0.000000e+00> : vector<8x256xf32>
    %185 = tpu.matmul %176, %11, %cst_71 {dimension_numbers = #tpu.dot_dimension_numbers<[1], [0], [0], [1], [0, 0, 1, 1], [], []>} : vector<8x128xf32>, vector<128x256xf32>, vector<8x256xf32> -> vector<8x256xf32>
    %186 = arith.addf %184, %185 : vector<8x256xf32>
    %187 = vector.extract_strided_slice %186 {offsets = [0, 0], sizes = [8, 128], strides = [1, 1]} : vector<8x256xf32> to vector<8x128xf32>
    %cst_72 = arith.constant 0.000000e+00 : f32
    %188 = vector.broadcast %cst_72 : f32 to vector<8x128xf32>
    %189 = arith.maximumf %187, %188 : vector<8x128xf32>
    %190 = vector.extract_strided_slice %186 {offsets = [0, 128], sizes = [8, 128], strides = [1, 1]} : vector<8x256xf32> to vector<8x128xf32>
    %191 = arith.negf %190 : vector<8x128xf32>
    %192 = math.exp %191 : vector<8x128xf32>
    %cst_73 = arith.constant 1.000000e+00 : f32
    %193 = vector.broadcast %cst_73 : f32 to vector<8x128xf32>
    %194 = arith.addf %193, %192 : vector<8x128xf32>
    %195 = arith.divf %193, %194 : vector<8x128xf32>
    %196 = arith.mulf %195, %176 : vector<8x128xf32>
    %cst_74 = arith.constant 1.000000e+00 : f32
    %197 = vector.broadcast %cst_74 : f32 to vector<8x128xf32>
    %198 = arith.subf %197, %195 : vector<8x128xf32>
    %199 = arith.mulf %198, %189 : vector<8x128xf32>
    %200 = arith.addf %196, %199 : vector<8x128xf32>
    %201 = arith.index_cast %c7_i32 : i32 to index
    %c0_75 = arith.constant 0 : index
    %c0_76 = arith.constant 0 : index
    %202 = vector.load %arg6[%201, %c0_75, %c0_76] : memref<8x8x128xf32, #tpu.memory_space<vmem>>, vector<1x8x128xf32>
    %203 = vector.shape_cast %202 : vector<1x8x128xf32> to vector<8x128xf32>
    %204 = vector.shape_cast %200 : vector<8x128xf32> to vector<1x8x128xf32>
    tpu.vector_store %arg6[%201, %c0_75, %c0_76], %204 {strides = array<i32>} : memref<8x8x128xf32, #tpu.memory_space<vmem>>, vector<1x8x128xf32>,
    %c8_i32_77 = arith.constant 8 : i32
    %c0_78 = arith.constant 0 : index
    %c0_79 = arith.constant 0 : index
    %205 = vector.load %arg8[%c0_78, %c0_79] : memref<8x128xf32, #tpu.memory_space<vmem>>, vector<8x128xf32>
    tpu.vector_store %arg8[%c0_78, %c0_79], %200 {strides = array<i32>} : memref<8x128xf32, #tpu.memory_space<vmem>>, vector<8x128xf32>,
    return
  }
  func.func @transform_0(%arg0: i32, %arg1: i32) -> (i32, i32, i32) {
    %c0_i32 = arith.constant 0 : i32
    %c0_i32_0 = arith.constant 0 : i32
    return %arg1, %arg0, %c0_i32 : i32, i32, i32
  }
  func.func @transform_1(%arg0: i32, %arg1: i32) -> (i32, i32) {
    %c0_i32 = arith.constant 0 : i32
    %c0_i32_0 = arith.constant 0 : i32
    %c0_i32_1 = arith.constant 0 : i32
    return %c0_i32, %c0_i32_0 : i32, i32
  }
  func.func @transform_2(%arg0: i32, %arg1: i32) -> (i32, i32) {
    %c0_i32 = arith.constant 0 : i32
    %c0_i32_0 = arith.constant 0 : i32
    %c0_i32_1 = arith.constant 0 : i32
    return %c0_i32, %c0_i32_0 : i32, i32
  }
  func.func @transform_3(%arg0: i32, %arg1: i32) -> (i32, i32) {
    %c0_i32 = arith.constant 0 : i32
    %c0_i32_0 = arith.constant 0 : i32
    %c0_i32_1 = arith.constant 0 : i32
    return %c0_i32, %c0_i32_0 : i32, i32
  }
  func.func @transform_4(%arg0: i32, %arg1: i32) -> (i32, i32, i32) {
    %c0_i32 = arith.constant 0 : i32
    %c0_i32_0 = arith.constant 0 : i32
    return %arg1, %arg0, %c0_i32 : i32, i32, i32
  }
}

</mosaic_0001>

<llo_original>
// kernel: tpu_custom_call.1
$region0: #{tpu_custom_call.1}
  #allocation0 [shape = 'u32[]', space=smem, size = 0x4, offset = 0x4, fixed_abs, tag = 'smem constant byte address 0x4 - core index']
  #allocation1 [shape = 'u32[144,128]{1,0:T(1,128)}', space=vmem, size = 0x12000, scoped, tag = 'internal scratch']
  #allocation2 [shape = 'f32[64,256]{1,0:T(8,128)}', space=vmem, size = 0x10000, scoped, tag = 'scratch operand']
  #allocation3 [shape = 'f32[8,128]{1,0:T(8,128)}', space=vmem, size = 0x1000, scoped, tag = 'scratch operand']
  %s0 = inlined_call_operand.hbm [shape: f32[8,8,16], index: 0, kind: input, shape index: {}]
  %s1 = inlined_call_operand.hbm [shape: f32[16,256], index: 1, kind: input, shape index: {}]
  %s2 = inlined_call_operand.hbm [shape: f32[1,256], index: 2, kind: input, shape index: {}]
  %s3 = inlined_call_operand.hbm [shape: f32[128,256], index: 3, kind: input, shape index: {}]
  %s4 = inlined_call_operand.hbm [shape: f32[8,8,128], index: 4, kind: output, shape index: {}]
  %s5 = sld [smem:[#allocation0]]
  $region46: #{tpu_custom_call.1} parent=0
    _
  %s7 = ssub.s32 1, %s5
  %s8 = scalar_select 0, %s7, %s5
  $region1: #{tpu_custom_call.1} parent=0
    #allocation4 [shape = 'u8[32768]{0}', space=vmem, size = 0x8000, scoped, tag = 'input window, operand 0, single buffered']
    #allocation5 [shape = 's32[1]{0}', space=sflag, size = 0x4, scoped, tag = 'scoped memory for tpu_custom_call.1']
    #allocation6 [shape = 's32[1]{0}', space=sflag, size = 0x4, scoped, tag = 'scoped memory for tpu_custom_call.1']
    #allocation7 [shape = 'u8[16384]{0}', space=vmem, size = 0x4000, scoped, tag = 'input window, operand 1, single buffered']
    #allocation8 [shape = 's32[1]{0}', space=sflag, size = 0x4, scoped, tag = 'scoped memory for tpu_custom_call.1']
    #allocation9 [shape = 'u8[1024]{0}', space=vmem, size = 0x400, scoped, tag = 'input window, operand 2, single buffered']
    #allocation10 [shape = 'u8[131072]{0}', space=vmem, size = 0x20000, scoped, tag = 'input window, operand 3, single buffered']
    #allocation11 [shape = 's32[1]{0}', space=sflag, size = 0x4, scoped, tag = 'scoped memory for tpu_custom_call.1']
    #allocation12 [shape = 'u8[32768]{0}', space=vmem, size = 0x8000, scoped, tag = 'output window, operand 0, single buffered']
    %9 = vsyncpa [#allocation5], 0
    %10 = vsyncpa [#allocation8], 0
    %11 = vsyncpa [#allocation11], 0
    %12 = vsyncpa [#allocation6], 0
    // Predicated region
    $region2: #{tpu_custom_call.1} parent=1 // pred_check
      _
    $region3: #{tpu_custom_call.1} parent=1 // pred_check_branch
      %14 = sbr.rel (0) target = $region5
    $region4: #{tpu_custom_call.1} parent=1 // pred_region
      %s16 = ssub.s32 1024, 1024
      %17 = vsyncadd [#allocation5], %s16
      %s18 = sshll.u32 [#allocation4], 4
      %s19 = int_to_ptr.vmem [resolvable:$true] %s18
      %24 = dma.hbm_to_vmem [thread:$0]  %s0, 1024, %s19, [#allocation5], 128, 128, 8
    $region5: #{tpu_custom_call.1} parent=1 // pred_fallthru
      _
    // Predicated region
    $region6: #{tpu_custom_call.1} parent=1 // pred_check
      _
    $region7: #{tpu_custom_call.1} parent=1 // pred_check_branch
      %26 = sbr.rel (0) target = $region9
    $region8: #{tpu_custom_call.1} parent=1 // pred_region
      %s28 = ssub.s32 512, 512
      %29 = vsyncadd [#allocation8], %s28
      %s30 = sshll.u32 [#allocation7], 4
      %s31 = int_to_ptr.vmem [resolvable:$true] %s30
      %36 = dma.hbm_to_vmem [thread:$0]  %s1, 512, %s31, [#allocation8], 256, 256, 16
    $region9: #{tpu_custom_call.1} parent=1 // pred_fallthru
      _
    // Predicated region
    $region10: #{tpu_custom_call.1} parent=1 // pred_check
      _
    $region11: #{tpu_custom_call.1} parent=1 // pred_check_branch
      %38 = sbr.rel (0) target = $region13
    $region12: #{tpu_custom_call.1} parent=1 // pred_region
      %s40 = ssub.s32 32, 32
      %41 = vsyncadd [#allocation8], %s40
      %s43 = sshll.u32 [#allocation9], 4
      %s44 = int_to_ptr.vmem [resolvable:$true] %s43
      %46 = dma.hbm_to_vmem [thread:$0]  %s2, 32, %s44, [#allocation8]
    $region13: #{tpu_custom_call.1} parent=1 // pred_fallthru
      _
    // Predicated region
    $region14: #{tpu_custom_call.1} parent=1 // pred_check
      _
    $region15: #{tpu_custom_call.1} parent=1 // pred_check_branch
      %48 = sbr.rel (0) target = $region17
    $region16: #{tpu_custom_call.1} parent=1 // pred_region
      %s50 = ssub.s32 4096, 4096
      %51 = vsyncadd [#allocation11], %s50
      %s52 = sshll.u32 [#allocation10], 4
      %s53 = int_to_ptr.vmem [resolvable:$true] %s52
      %58 = dma.hbm_to_vmem [thread:$0]  %s3, 4096, %s53, [#allocation11], 256, 256, 16
    $region17: #{tpu_custom_call.1} parent=1 // pred_fallthru
      _
    // Predicated region
    $region18: #{tpu_custom_call.1} parent=1 // pred_check
      _
    $region19: #{tpu_custom_call.1} parent=1 // pred_check_branch
      %60 = sbr.rel (0) target = $region21
    $region20: #{tpu_custom_call.1} parent=1 // pred_region
      %61 = dma.done [#allocation5], 1024
    $region21: #{tpu_custom_call.1} parent=1 // pred_fallthru
      _
    // Predicated region
    $region22: #{tpu_custom_call.1} parent=1 // pred_check
      _
    $region23: #{tpu_custom_call.1} parent=1 // pred_check_branch
      %63 = sbr.rel (0) target = $region25
    $region24: #{tpu_custom_call.1} parent=1 // pred_region
      %64 = dma.done [#allocation8], 512
    $region25: #{tpu_custom_call.1} parent=1 // pred_fallthru
      _
    // Predicated region
    $region26: #{tpu_custom_call.1} parent=1 // pred_check
      _
    $region27: #{tpu_custom_call.1} parent=1 // pred_check_branch
      %66 = sbr.rel (0) target = $region29
    $region28: #{tpu_custom_call.1} parent=1 // pred_region
      %67 = dma.done [#allocation8], 32
    $region29: #{tpu_custom_call.1} parent=1 // pred_fallthru
      _
    // Predicated region
    $region30: #{tpu_custom_call.1} parent=1 // pred_check
      _
    $region31: #{tpu_custom_call.1} parent=1 // pred_check_branch
      %69 = sbr.rel (0) target = $region33
    $region32: #{tpu_custom_call.1} parent=1 // pred_region
      %70 = dma.done [#allocation11], 4096
    $region33: #{tpu_custom_call.1} parent=1 // pred_fallthru
      _
    %p71 = scmp.eq.s32.totalorder 0, 0
    // Predicated region
    $region34: #{tpu_custom_call.1} parent=1 // pred_check
      %p72 = pneg %p71
    $region35: #{tpu_custom_call.1} parent=1 // pred_check_branch
      %74 = sbr.rel (%p72) target = $region37
    $region36: #{tpu_custom_call.1} parent=1 // pred_region
      %75 = vst [vmem:[#allocation3] sm:$0xff] 0.0
    $region37: #{tpu_custom_call.1} parent=1 // pred_fallthru
      _
    %v76 = vld [vmem:[#allocation4] sm:$0xff]
    %v77 = vld [vmem:[#allocation4 + $0x8] sm:$0xff]
    %v78 = vld [vmem:[#allocation4 + $0x10] sm:$0xff]
    %v79 = vld [vmem:[#allocation4 + $0x18] sm:$0xff]
    %v80 = vld [vmem:[#allocation4 + $0x20] sm:$0xff]
    %v81 = vld [vmem:[#allocation4 + $0x28] sm:$0xff]
    %v82 = vld [vmem:[#allocation4 + $0x30] sm:$0xff]
    %v83 = vld [vmem:[#allocation4 + $0x38] sm:$0xff]
    %v84 = vld [vmem:[#allocation7] sm:$0xff]
    %v85 = vld [vmem:[#allocation7 + $0x8] sm:$0xff]
    %v86 = vld [vmem:[#allocation7 + $0x10] sm:$0xff]
    %v87 = vld [vmem:[#allocation7 + $0x18] sm:$0xff]
    %v88 = vld [vmem:[#allocation9] sm:$0x3]
    %v90 = vlaneseq
    %v91 = vshrl.u32 %v90, 7
    %v92 = vsub.s32 0, %v91
    %v93 = vrot.slane %v88, %v92
    %v94 = vlaneseq
    %v95 = vshrl.u32 %v94, 7
    %v96 = vsub.s32 1, %v95
    %v97 = vrot.slane %v88, %v96
    %vm100 = vcmask 130048
    %v102 = vsel %vm100, %v76, 0
    %v105 = vsel %vm100, %v77, 0
    %v108 = vsel %vm100, %v78, 0
    %v111 = vsel %vm100, %v79, 0
    %v114 = vsel %vm100, %v80, 0
    %v117 = vsel %vm100, %v81, 0
    %v120 = vsel %vm100, %v82, 0
    %v123 = vsel %vm100, %v83, 0
    %125 = vmatprep.subr.mxu0 %v85
    %126 = vmatpush1.msra.mxu0 %v84
    %127 = vmatprep.subr.mxu0 %v87
    %128 = vmatpush1.msra.mxu0 %v86
    %129 = vmatprep.subr.mxu0 0.0
    %130 = vmatpush1.msra.mxu0 0.0
    %131 = vmatprep.subr.mxu0 0.0
    %132 = vmatpush1.msra.mxu0 0.0
    %133 = vmatprep.subr.mxu0 0.0
    %134 = vmatpush1.msra.mxu0 0.0
    %135 = vmatprep.subr.mxu0 0.0
    %136 = vmatpush1.msra.mxu0 0.0
    %137 = vmatprep.subr.mxu0 0.0
    %138 = vmatpush1.msra.mxu0 0.0
    %139 = vmatprep.subr.mxu0 0.0
    %140 = vmatpush1.msra.mxu0 0.0
    %141 = vmatprep.subr.mxu0 0.0
    %142 = vmatpush1.msra.mxu0 0.0
    %143 = vmatprep.subr.mxu0 0.0
    %144 = vmatpush1.msra.mxu0 0.0
    %145 = vmatprep.subr.mxu0 0.0
    %146 = vmatpush1.msra.mxu0 0.0
    %147 = vmatprep.subr.mxu0 0.0
    %148 = vmatpush1.msra.mxu0 0.0
    %149 = vmatprep.subr.mxu0 0.0
    %150 = vmatpush1.msra.mxu0 0.0
    %151 = vmatprep.subr.mxu0 0.0
    %152 = vmatpush1.msra.mxu0 0.0
    %153 = vmatprep.subr.mxu0 0.0
    %154 = vmatpush1.msra.mxu0 0.0
    %155 = vmatprep.subr.mxu0 0.0
    %156 = vmatpush1.msra.mxu0 0.0
    %157 = vmatprep.subr.mxu0 0.0
    %158 = vmatpush1.msra.mxu0 0.0
    %159 = vmatprep.subr.mxu0 0.0
    %160 = vmatpush1.msra.mxu0 0.0
    %161 = vmatprep.subr.mxu0 0.0
    %162 = vmatpush1.msra.mxu0 0.0
    %163 = vmatprep.subr.mxu0 0.0
    %164 = vmatpush1.msra.mxu0 0.0
    %165 = vmatprep.subr.mxu0 0.0
    %166 = vmatpush1.msra.mxu0 0.0
    %167 = vmatprep.subr.mxu0 0.0
    %168 = vmatpush1.msra.mxu0 0.0
    %169 = vmatprep.subr.mxu0 0.0
    %170 = vmatpush1.msra.mxu0 0.0
    %171 = vmatprep.subr.mxu0 0.0
    %172 = vmatpush1.msra.mxu0 0.0
    %173 = vmatprep.subr.mxu0 0.0
    %174 = vmatpush1.msra.mxu0 0.0
    %175 = vmatprep.subr.mxu0 0.0
    %176 = vmatpush1.msra.mxu0 0.0
    %177 = vmatprep.subr.mxu0 0.0
    %178 = vmatpush1.msra.mxu0 0.0
    %179 = vmatprep.subr.mxu0 0.0
    %180 = vmatpush1.msra.mxu0 0.0
    %181 = vmatprep.subr.mxu0 0.0
    %182 = vmatpush1.msra.mxu0 0.0
    %183 = vmatprep.subr.mxu0 0.0
    %184 = vmatpush1.msra.mxu0 0.0
    %185 = vmatprep.subr.mxu0 0.0
    %186 = vmatpush1.msra.mxu0 0.0
    %187 = vmatprep.subr.mxu0 0.0
    %188 = vmatpush1.msra.mxu0 0.0
    %189 = vmatprep.mubr.f32.mxu0 0.0
    %190 = vmatmul.mubr.f32.gmra.mrb[0].mxu0 %v102
    %v191 = vpop.f32.mrb[0].mxu0
    %v192 = vadd.f32 %v93, %v191
    %v193 = vpop.f32.mrb[0].mxu0
    %v194 = vadd.f32 %v97, %v193
    %195 = vmatprep.mubr.f32.mxu0 0.0
    %196 = vmatmul.mubr.f32.gmra.mrb[0].mxu0 %v105
    %v197 = vpop.f32.mrb[0].mxu0
    %v198 = vadd.f32 %v93, %v197
    %v199 = vpop.f32.mrb[0].mxu0
    %v200 = vadd.f32 %v97, %v199
    %201 = vmatprep.mubr.f32.mxu0 0.0
    %202 = vmatmul.mubr.f32.gmra.mrb[0].mxu0 %v108
    %v203 = vpop.f32.mrb[0].mxu0
    %v204 = vadd.f32 %v93, %v203
    %v205 = vpop.f32.mrb[0].mxu0
    %v206 = vadd.f32 %v97, %v205
    %207 = vmatprep.mubr.f32.mxu0 0.0
    %208 = vmatmul.mubr.f32.gmra.mrb[0].mxu0 %v111
    %v209 = vpop.f32.mrb[0].mxu0
    %v210 = vadd.f32 %v93, %v209
    %v211 = vpop.f32.mrb[0].mxu0
    %v212 = vadd.f32 %v97, %v211
    %213 = vmatprep.mubr.f32.mxu0 0.0
    %214 = vmatmul.mubr.f32.gmra.mrb[0].mxu0 %v114
    %v215 = vpop.f32.mrb[0].mxu0
    %v216 = vadd.f32 %v93, %v215
    %v217 = vpop.f32.mrb[0].mxu0
    %v218 = vadd.f32 %v97, %v217
    %219 = vmatprep.mubr.f32.mxu0 0.0
    %220 = vmatmul.mubr.f32.gmra.mrb[0].mxu0 %v117
    %v221 = vpop.f32.mrb[0].mxu0
    %v222 = vadd.f32 %v93, %v221
    %v223 = vpop.f32.mrb[0].mxu0
    %v224 = vadd.f32 %v97, %v223
    %225 = vmatprep.mubr.f32.mxu0 0.0
    %226 = vmatmul.mubr.f32.gmra.mrb[0].mxu0 %v120
    %v227 = vpop.f32.mrb[0].mxu0
    %v228 = vadd.f32 %v93, %v227
    %v229 = vpop.f32.mrb[0].mxu0
    %v230 = vadd.f32 %v97, %v229
    %231 = vmatprep.mubr.f32.mxu0 0.0
    %232 = vmatmul.mubr.f32.gmra.mrb[0].mxu0 %v123
    %v233 = vpop.f32.mrb[0].mxu0
    %v234 = vadd.f32 %v93, %v233
    %v235 = vpop.f32.mrb[0].mxu0
    %v236 = vadd.f32 %v97, %v235
    %237 = vdwg.mxu0
    %238 = vst [vmem:[#allocation2] sm:$0xff] %v192
    %239 = vst [vmem:[#allocation2 + $0x8] sm:$0xff] %v194
    %240 = vst [vmem:[#allocation2 + $0x10] sm:$0xff] %v198
    %241 = vst [vmem:[#allocation2 + $0x18] sm:$0xff] %v200
    %242 = vst [vmem:[#allocation2 + $0x20] sm:$0xff] %v204
    %243 = vst [vmem:[#allocation2 + $0x28] sm:$0xff] %v206
    %244 = vst [vmem:[#allocation2 + $0x30] sm:$0xff] %v210
    %245 = vst [vmem:[#allocation2 + $0x38] sm:$0xff] %v212
    %246 = vst [vmem:[#allocation2 + $0x40] sm:$0xff] %v216
    %247 = vst [vmem:[#allocation2 + $0x48] sm:$0xff] %v218
    %248 = vst [vmem:[#allocation2 + $0x50] sm:$0xff] %v222
    %249 = vst [vmem:[#allocation2 + $0x58] sm:$0xff] %v224
    %250 = vst [vmem:[#allocation2 + $0x60] sm:$0xff] %v228
    %251 = vst [vmem:[#allocation2 + $0x68] sm:$0xff] %v230
    %252 = vst [vmem:[#allocation2 + $0x70] sm:$0xff] %v234
    %253 = vst [vmem:[#allocation2 + $0x78] sm:$0xff] %v236
    %v254 = vld [vmem:[#allocation10] sm:$0xff]
    %v255 = vld [vmem:[#allocation10 + $0x8] sm:$0xff]
    %v256 = vld [vmem:[#allocation10 + $0x10] sm:$0xff]
    %v257 = vld [vmem:[#allocation10 + $0x18] sm:$0xff]
    %v258 = vld [vmem:[#allocation10 + $0x20] sm:$0xff]
    %v259 = vld [vmem:[#allocation10 + $0x28] sm:$0xff]
    %v260 = vld [vmem:[#allocation10 + $0x30] sm:$0xff]
    %v261 = vld [vmem:[#allocation10 + $0x38] sm:$0xff]
    %v262 = vld [vmem:[#allocation10 + $0x40] sm:$0xff]
    %v263 = vld [vmem:[#allocation10 + $0x48] sm:$0xff]
    %v264 = vld [vmem:[#allocation10 + $0x50] sm:$0xff]
    %v265 = vld [vmem:[#allocation10 + $0x58] sm:$0xff]
    %v266 = vld [vmem:[#allocation10 + $0x60] sm:$0xff]
    %v267 = vld [vmem:[#allocation10 + $0x68] sm:$0xff]
    %v268 = vld [vmem:[#allocation10 + $0x70] sm:$0xff]
    %v269 = vld [vmem:[#allocation10 + $0x78] sm:$0xff]
    %v270 = vld [vmem:[#allocation10 + $0x80] sm:$0xff]
    %v271 = vld [vmem:[#allocation10 + $0x88] sm:$0xff]
    %v272 = vld [vmem:[#allocation10 + $0x90] sm:$0xff]
    %v273 = vld [vmem:[#allocation10 + $0x98] sm:$0xff]
    %v274 = vld [vmem:[#allocation10 + $0xa0] sm:$0xff]
    %v275 = vld [vmem:[#allocation10 + $0xa8] sm:$0xff]
    %v276 = vld [vmem:[#allocation10 + $0xb0] sm:$0xff]
    %v277 = vld [vmem:[#allocation10 + $0xb8] sm:$0xff]
    %v278 = vld [vmem:[#allocation10 + $0xc0] sm:$0xff]
    %v279 = vld [vmem:[#allocation10 + $0xc8] sm:$0xff]
    %v280 = vld [vmem:[#allocation10 + $0xd0] sm:$0xff]
    %v281 = vld [vmem:[#allocation10 + $0xd8] sm:$0xff]
    %v282 = vld [vmem:[#allocation10 + $0xe0] sm:$0xff]
    %v283 = vld [vmem:[#allocation10 + $0xe8] sm:$0xff]
    %v284 = vld [vmem:[#allocation10 + $0xf0] sm:$0xff]
    %v285 = vld [vmem:[#allocation10 + $0xf8] sm:$0xff]
    %v286 = vld [vmem:[#allocation3] sm:$0xff]
    %s287 = smul.u32 0, 2
    %s288 = smul.addr %s287, 8
    %s289 = scalar_lea.vmem [#allocation2], %s288
    %v290 = vld [vmem:[%s289] sm:$0xff]
    %v291 = vld [vmem:[%s289 + $0x8] sm:$0xff]
    %292 = vmatprep.subr.mxu0 %v255
    %293 = vmatpush1.msra.mxu0 %v254
    %294 = vmatprep.subr.mxu0 %v257
    %295 = vmatpush1.msra.mxu0 %v256
    %296 = vmatprep.subr.mxu0 %v259
    %297 = vmatpush1.msra.mxu0 %v258
    %298 = vmatprep.subr.mxu0 %v261
    %299 = vmatpush1.msra.mxu0 %v260
    %300 = vmatprep.subr.mxu0 %v263
    %301 = vmatpush1.msra.mxu0 %v262
    %302 = vmatprep.subr.mxu0 %v265
    %303 = vmatpush1.msra.mxu0 %v264
    %304 = vmatprep.subr.mxu0 %v267
    %305 = vmatpush1.msra.mxu0 %v266
    %306 = vmatprep.subr.mxu0 %v269
    %307 = vmatpush1.msra.mxu0 %v268
    %308 = vmatprep.subr.mxu0 %v271
    %309 = vmatpush1.msra.mxu0 %v270
    %310 = vmatprep.subr.mxu0 %v273
    %311 = vmatpush1.msra.mxu0 %v272
    %312 = vmatprep.subr.mxu0 %v275
    %313 = vmatpush1.msra.mxu0 %v274
    %314 = vmatprep.subr.mxu0 %v277
    %315 = vmatpush1.msra.mxu0 %v276
    %316 = vmatprep.subr.mxu0 %v279
    %317 = vmatpush1.msra.mxu0 %v278
    %318 = vmatprep.subr.mxu0 %v281
    %319 = vmatpush1.msra.mxu0 %v280
    %320 = vmatprep.subr.mxu0 %v283
    %321 = vmatpush1.msra.mxu0 %v282
    %322 = vmatprep.subr.mxu0 %v285
    %323 = vmatpush1.msra.mxu0 %v284
    %324 = vmatprep.subr.mxu0 0.0
    %325 = vmatpush1.msra.mxu0 0.0
    %326 = vmatprep.subr.mxu0 0.0
    %327 = vmatpush1.msra.mxu0 0.0
    %328 = vmatprep.subr.mxu0 0.0
    %329 = vmatpush1.msra.mxu0 0.0
    %330 = vmatprep.subr.mxu0 0.0
    %331 = vmatpush1.msra.mxu0 0.0
    %332 = vmatprep.subr.mxu0 0.0
    %333 = vmatpush1.msra.mxu0 0.0
    %334 = vmatprep.subr.mxu0 0.0
    %335 = vmatpush1.msra.mxu0 0.0
    %336 = vmatprep.subr.mxu0 0.0
    %337 = vmatpush1.msra.mxu0 0.0
    %338 = vmatprep.subr.mxu0 0.0
    %339 = vmatpush1.msra.mxu0 0.0
    %340 = vmatprep.subr.mxu0 0.0
    %341 = vmatpush1.msra.mxu0 0.0
    %342 = vmatprep.subr.mxu0 0.0
    %343 = vmatpush1.msra.mxu0 0.0
    %344 = vmatprep.subr.mxu0 0.0
    %345 = vmatpush1.msra.mxu0 0.0
    %346 = vmatprep.subr.mxu0 0.0
    %347 = vmatpush1.msra.mxu0 0.0
    %348 = vmatprep.subr.mxu0 0.0
    %349 = vmatpush1.msra.mxu0 0.0
    %350 = vmatprep.subr.mxu0 0.0
    %351 = vmatpush1.msra.mxu0 0.0
    %352 = vmatprep.subr.mxu0 0.0
    %353 = vmatpush1.msra.mxu0 0.0
    %354 = vmatprep.subr.mxu0 0.0
    %355 = vmatpush1.msra.mxu0 0.0
    %356 = vmatprep.mubr.f32.mxu0 0.0
    %357 = vmatmul.mubr.f32.gmra.mrb[0].mxu0 %v286
    %v358 = vpop.f32.mrb[0].mxu0
    %v359 = vadd.f32 0.0, %v358
    %v360 = vpop.f32.mrb[0].mxu0
    %v361 = vadd.f32 0.0, %v360
    %362 = vdwg.mxu0
    %v363 = vadd.f32 %v290, %v359
    %v364 = vadd.f32 %v291, %v361
    %v365 = vmax.f32 %v363, 0.0
    %v366 = vxor.u32 %v364, 2147483648
    %v367 = vmul.f32 %v366, 1.442695
    %v368 = vpow.pop %v367
    %v369 = vadd.f32 %v368, 1.0
    %v370 = vrcp.pop %v369
    %v371 = vmul.f32 1.0, %v370
    %v372 = vmul.f32 %v371, %v286
    %v373 = vsub.f32 1.0, %v371
    %v374 = vmul.f32 %v373, %v365
    %v375 = vadd.f32 %v372, %v374
    %376 = vst [vmem:[#allocation12] sm:$0xff] %v375
    %s377 = smul.u32 1, 2
    %s378 = smul.addr %s377, 8
    %s379 = scalar_lea.vmem [#allocation2], %s378
    %v380 = vld [vmem:[%s379] sm:$0xff]
    %v381 = vld [vmem:[%s379 + $0x8] sm:$0xff]
    %382 = vmatprep.subr.mxu0 %v255
    %383 = vmatpush1.msra.mxu0 %v254
    %384 = vmatprep.subr.mxu0 %v257
    %385 = vmatpush1.msra.mxu0 %v256
    %386 = vmatprep.subr.mxu0 %v259
    %387 = vmatpush1.msra.mxu0 %v258
    %388 = vmatprep.subr.mxu0 %v261
    %389 = vmatpush1.msra.mxu0 %v260
    %390 = vmatprep.subr.mxu0 %v263
    %391 = vmatpush1.msra.mxu0 %v262
    %392 = vmatprep.subr.mxu0 %v265
    %393 = vmatpush1.msra.mxu0 %v264
    %394 = vmatprep.subr.mxu0 %v267
    %395 = vmatpush1.msra.mxu0 %v266
    %396 = vmatprep.subr.mxu0 %v269
    %397 = vmatpush1.msra.mxu0 %v268
    %398 = vmatprep.subr.mxu0 %v271
    %399 = vmatpush1.msra.mxu0 %v270
    %400 = vmatprep.subr.mxu0 %v273
    %401 = vmatpush1.msra.mxu0 %v272
    %402 = vmatprep.subr.mxu0 %v275
    %403 = vmatpush1.msra.mxu0 %v274
    %404 = vmatprep.subr.mxu0 %v277
    %405 = vmatpush1.msra.mxu0 %v276
    %406 = vmatprep.subr.mxu0 %v279
    %407 = vmatpush1.msra.mxu0 %v278
    %408 = vmatprep.subr.mxu0 %v281
    %409 = vmatpush1.msra.mxu0 %v280
    %410 = vmatprep.subr.mxu0 %v283
    %411 = vmatpush1.msra.mxu0 %v282
    %412 = vmatprep.subr.mxu0 %v285
    %413 = vmatpush1.msra.mxu0 %v284
    %414 = vmatprep.subr.mxu0 0.0
    %415 = vmatpush1.msra.mxu0 0.0
    %416 = vmatprep.subr.mxu0 0.0
    %417 = vmatpush1.msra.mxu0 0.0
    %418 = vmatprep.subr.mxu0 0.0
    %419 = vmatpush1.msra.mxu0 0.0
    %420 = vmatprep.subr.mxu0 0.0
    %421 = vmatpush1.msra.mxu0 0.0
    %422 = vmatprep.subr.mxu0 0.0
    %423 = vmatpush1.msra.mxu0 0.0
    %424 = vmatprep.subr.mxu0 0.0
    %425 = vmatpush1.msra.mxu0 0.0
    %426 = vmatprep.subr.mxu0 0.0
    %427 = vmatpush1.msra.mxu0 0.0
    %428 = vmatprep.subr.mxu0 0.0
    %429 = vmatpush1.msra.mxu0 0.0
    %430 = vmatprep.subr.mxu0 0.0
    %431 = vmatpush1.msra.mxu0 0.0
    %432 = vmatprep.subr.mxu0 0.0
    %433 = vmatpush1.msra.mxu0 0.0
    %434 = vmatprep.subr.mxu0 0.0
    %435 = vmatpush1.msra.mxu0 0.0
    %436 = vmatprep.subr.mxu0 0.0
    %437 = vmatpush1.msra.mxu0 0.0
    %438 = vmatprep.subr.mxu0 0.0
    %439 = vmatpush1.msra.mxu0 0.0
    %440 = vmatprep.subr.mxu0 0.0
    %441 = vmatpush1.msra.mxu0 0.0
    %442 = vmatprep.subr.mxu0 0.0
    %443 = vmatpush1.msra.mxu0 0.0
    %444 = vmatprep.subr.mxu0 0.0
    %445 = vmatpush1.msra.mxu0 0.0
    %446 = vmatprep.mubr.f32.mxu0 0.0
    %447 = vmatmul.mubr.f32.gmra.mrb[0].mxu0 %v375
    %v448 = vpop.f32.mrb[0].mxu0
    %v449 = vadd.f32 0.0, %v448
    %v450 = vpop.f32.mrb[0].mxu0
    %v451 = vadd.f32 0.0, %v450
    %452 = vdwg.mxu0
    %v453 = vadd.f32 %v380, %v449
    %v454 = vadd.f32 %v381, %v451
    %v455 = vmax.f32 %v453, 0.0
    %v456 = vxor.u32 %v454, 2147483648
    %v457 = vmul.f32 %v456, 1.442695
    %v458 = vpow.pop %v457
    %v459 = vadd.f32 %v458, 1.0
    %v460 = vrcp.pop %v459
    %v461 = vmul.f32 1.0, %v460
    %v462 = vmul.f32 %v461, %v375
    %v463 = vsub.f32 1.0, %v461
    %v464 = vmul.f32 %v463, %v455
    %v465 = vadd.f32 %v462, %v464
    %s466 = scalar_lea.vmem [#allocation12], 8
    %467 = vst [vmem:[%s466] sm:$0xff] %v465
    %s468 = smul.u32 2, 2
    %s469 = smul.addr %s468, 8
    %s470 = scalar_lea.vmem [#allocation2], %s469
    %v471 = vld [vmem:[%s470] sm:$0xff]
    %v472 = vld [vmem:[%s470 + $0x8] sm:$0xff]
    %473 = vmatprep.subr.mxu0 %v255
    %474 = vmatpush1.msra.mxu0 %v254
    %475 = vmatprep.subr.mxu0 %v257
    %476 = vmatpush1.msra.mxu0 %v256
    %477 = vmatprep.subr.mxu0 %v259
    %478 = vmatpush1.msra.mxu0 %v258
    %479 = vmatprep.subr.mxu0 %v261
    %480 = vmatpush1.msra.mxu0 %v260
    %481 = vmatprep.subr.mxu0 %v263
    %482 = vmatpush1.msra.mxu0 %v262
    %483 = vmatprep.subr.mxu0 %v265
    %484 = vmatpush1.msra.mxu0 %v264
    %485 = vmatprep.subr.mxu0 %v267
    %486 = vmatpush1.msra.mxu0 %v266
    %487 = vmatprep.subr.mxu0 %v269
    %488 = vmatpush1.msra.mxu0 %v268
    %489 = vmatprep.subr.mxu0 %v271
    %490 = vmatpush1.msra.mxu0 %v270
    %491 = vmatprep.subr.mxu0 %v273
    %492 = vmatpush1.msra.mxu0 %v272
    %493 = vmatprep.subr.mxu0 %v275
    %494 = vmatpush1.msra.mxu0 %v274
    %495 = vmatprep.subr.mxu0 %v277
    %496 = vmatpush1.msra.mxu0 %v276
    %497 = vmatprep.subr.mxu0 %v279
    %498 = vmatpush1.msra.mxu0 %v278
    %499 = vmatprep.subr.mxu0 %v281
    %500 = vmatpush1.msra.mxu0 %v280
    %501 = vmatprep.subr.mxu0 %v283
    %502 = vmatpush1.msra.mxu0 %v282
    %503 = vmatprep.subr.mxu0 %v285
    %504 = vmatpush1.msra.mxu0 %v284
    %505 = vmatprep.subr.mxu0 0.0
    %506 = vmatpush1.msra.mxu0 0.0
    %507 = vmatprep.subr.mxu0 0.0
    %508 = vmatpush1.msra.mxu0 0.0
    %509 = vmatprep.subr.mxu0 0.0
    %510 = vmatpush1.msra.mxu0 0.0
    %511 = vmatprep.subr.mxu0 0.0
    %512 = vmatpush1.msra.mxu0 0.0
    %513 = vmatprep.subr.mxu0 0.0
    %514 = vmatpush1.msra.mxu0 0.0
    %515 = vmatprep.subr.mxu0 0.0
    %516 = vmatpush1.msra.mxu0 0.0
    %517 = vmatprep.subr.mxu0 0.0
    %518 = vmatpush1.msra.mxu0 0.0
    %519 = vmatprep.subr.mxu0 0.0
    %520 = vmatpush1.msra.mxu0 0.0
    %521 = vmatprep.subr.mxu0 0.0
    %522 = vmatpush1.msra.mxu0 0.0
    %523 = vmatprep.subr.mxu0 0.0
    %524 = vmatpush1.msra.mxu0 0.0
    %525 = vmatprep.subr.mxu0 0.0
    %526 = vmatpush1.msra.mxu0 0.0
    %527 = vmatprep.subr.mxu0 0.0
    %528 = vmatpush1.msra.mxu0 0.0
    %529 = vmatprep.subr.mxu0 0.0
    %530 = vmatpush1.msra.mxu0 0.0
    %531 = vmatprep.subr.mxu0 0.0
    %532 = vmatpush1.msra.mxu0 0.0
    %533 = vmatprep.subr.mxu0 0.0
    %534 = vmatpush1.msra.mxu0 0.0
    %535 = vmatprep.subr.mxu0 0.0
    %536 = vmatpush1.msra.mxu0 0.0
    %537 = vmatprep.mubr.f32.mxu0 0.0
    %538 = vmatmul.mubr.f32.gmra.mrb[0].mxu0 %v465
    %v539 = vpop.f32.mrb[0].mxu0
    %v540 = vadd.f32 0.0, %v539
    %v541 = vpop.f32.mrb[0].mxu0
    %v542 = vadd.f32 0.0, %v541
    %543 = vdwg.mxu0
    %v544 = vadd.f32 %v471, %v540
    %v545 = vadd.f32 %v472, %v542
    %v546 = vmax.f32 %v544, 0.0
    %v547 = vxor.u32 %v545, 2147483648
    %v548 = vmul.f32 %v547, 1.442695
    %v549 = vpow.pop %v548
    %v550 = vadd.f32 %v549, 1.0
    %v551 = vrcp.pop %v550
    %v552 = vmul.f32 1.0, %v551
    %v553 = vmul.f32 %v552, %v465
    %v554 = vsub.f32 1.0, %v552
    %v555 = vmul.f32 %v554, %v546
    %v556 = vadd.f32 %v553, %v555
    %s557 = scalar_lea.vmem [#allocation12], 16
    %558 = vst [vmem:[%s557] sm:$0xff] %v556
    %s559 = smul.u32 3, 2
    %s560 = smul.addr %s559, 8
    %s561 = scalar_lea.vmem [#allocation2], %s560
    %v562 = vld [vmem:[%s561] sm:$0xff]
    %v563 = vld [vmem:[%s561 + $0x8] sm:$0xff]
    %564 = vmatprep.subr.mxu0 %v255
    %565 = vmatpush1.msra.mxu0 %v254
    %566 = vmatprep.subr.mxu0 %v257
    %567 = vmatpush1.msra.mxu0 %v256
    %568 = vmatprep.subr.mxu0 %v259
    %569 = vmatpush1.msra.mxu0 %v258
    %570 = vmatprep.subr.mxu0 %v261
    %571 = vmatpush1.msra.mxu0 %v260
    %572 = vmatprep.subr.mxu0 %v263
    %573 = vmatpush1.msra.mxu0 %v262
    %574 = vmatprep.subr.mxu0 %v265
    %575 = vmatpush1.msra.mxu0 %v264
    %576 = vmatprep.subr.mxu0 %v267
    %577 = vmatpush1.msra.mxu0 %v266
    %578 = vmatprep.subr.mxu0 %v269
    %579 = vmatpush1.msra.mxu0 %v268
    %580 = vmatprep.subr.mxu0 %v271
    %581 = vmatpush1.msra.mxu0 %v270
    %582 = vmatprep.subr.mxu0 %v273
    %583 = vmatpush1.msra.mxu0 %v272
    %584 = vmatprep.subr.mxu0 %v275
    %585 = vmatpush1.msra.mxu0 %v274
    %586 = vmatprep.subr.mxu0 %v277
    %587 = vmatpush1.msra.mxu0 %v276
    %588 = vmatprep.subr.mxu0 %v279
    %589 = vmatpush1.msra.mxu0 %v278
    %590 = vmatprep.subr.mxu0 %v281
    %591 = vmatpush1.msra.mxu0 %v280
    %592 = vmatprep.subr.mxu0 %v283
    %593 = vmatpush1.msra.mxu0 %v282
    %594 = vmatprep.subr.mxu0 %v285
    %595 = vmatpush1.msra.mxu0 %v284
    %596 = vmatprep.subr.mxu0 0.0
    %597 = vmatpush1.msra.mxu0 0.0
    %598 = vmatprep.subr.mxu0 0.0
    %599 = vmatpush1.msra.mxu0 0.0
    %600 = vmatprep.subr.mxu0 0.0
    %601 = vmatpush1.msra.mxu0 0.0
    %602 = vmatprep.subr.mxu0 0.0
    %603 = vmatpush1.msra.mxu0 0.0
    %604 = vmatprep.subr.mxu0 0.0
    %605 = vmatpush1.msra.mxu0 0.0
    %606 = vmatprep.subr.mxu0 0.0
    %607 = vmatpush1.msra.mxu0 0.0
    %608 = vmatprep.subr.mxu0 0.0
    %609 = vmatpush1.msra.mxu0 0.0
    %610 = vmatprep.subr.mxu0 0.0
    %611 = vmatpush1.msra.mxu0 0.0
    %612 = vmatprep.subr.mxu0 0.0
    %613 = vmatpush1.msra.mxu0 0.0
    %614 = vmatprep.subr.mxu0 0.0
    %615 = vmatpush1.msra.mxu0 0.0
    %616 = vmatprep.subr.mxu0 0.0
    %617 = vmatpush1.msra.mxu0 0.0
    %618 = vmatprep.subr.mxu0 0.0
    %619 = vmatpush1.msra.mxu0 0.0
    %620 = vmatprep.subr.mxu0 0.0
    %621 = vmatpush1.msra.mxu0 0.0
    %622 = vmatprep.subr.mxu0 0.0
    %623 = vmatpush1.msra.mxu0 0.0
    %624 = vmatprep.subr.mxu0 0.0
    %625 = vmatpush1.msra.mxu0 0.0
    %626 = vmatprep.subr.mxu0 0.0
    %627 = vmatpush1.msra.mxu0 0.0
    %628 = vmatprep.mubr.f32.mxu0 0.0
    %629 = vmatmul.mubr.f32.gmra.mrb[0].mxu0 %v556
    %v630 = vpop.f32.mrb[0].mxu0
    %v631 = vadd.f32 0.0, %v630
    %v632 = vpop.f32.mrb[0].mxu0
    %v633 = vadd.f32 0.0, %v632
    %634 = vdwg.mxu0
    %v635 = vadd.f32 %v562, %v631
    %v636 = vadd.f32 %v563, %v633
    %v637 = vmax.f32 %v635, 0.0
    %v638 = vxor.u32 %v636, 2147483648
    %v639 = vmul.f32 %v638, 1.442695
    %v640 = vpow.pop %v639
    %v641 = vadd.f32 %v640, 1.0
    %v642 = vrcp.pop %v641
    %v643 = vmul.f32 1.0, %v642
    %v644 = vmul.f32 %v643, %v556
    %v645 = vsub.f32 1.0, %v643
    %v646 = vmul.f32 %v645, %v637
    %v647 = vadd.f32 %v644, %v646
    %s648 = scalar_lea.vmem [#allocation12], 24
    %649 = vst [vmem:[%s648] sm:$0xff] %v647
    %s650 = smul.u32 4, 2
    %s651 = smul.addr %s650, 8
    %s652 = scalar_lea.vmem [#allocation2], %s651
    %v653 = vld [vmem:[%s652] sm:$0xff]
    %v654 = vld [vmem:[%s652 + $0x8] sm:$0xff]
    %655 = vmatprep.subr.mxu0 %v255
    %656 = vmatpush1.msra.mxu0 %v254
    %657 = vmatprep.subr.mxu0 %v257
    %658 = vmatpush1.msra.mxu0 %v256
    %659 = vmatprep.subr.mxu0 %v259
    %660 = vmatpush1.msra.mxu0 %v258
    %661 = vmatprep.subr.mxu0 %v261
    %662 = vmatpush1.msra.mxu0 %v260
    %663 = vmatprep.subr.mxu0 %v263
    %664 = vmatpush1.msra.mxu0 %v262
    %665 = vmatprep.subr.mxu0 %v265
    %666 = vmatpush1.msra.mxu0 %v264
    %667 = vmatprep.subr.mxu0 %v267
    %668 = vmatpush1.msra.mxu0 %v266
    %669 = vmatprep.subr.mxu0 %v269
    %670 = vmatpush1.msra.mxu0 %v268
    %671 = vmatprep.subr.mxu0 %v271
    %672 = vmatpush1.msra.mxu0 %v270
    %673 = vmatprep.subr.mxu0 %v273
    %674 = vmatpush1.msra.mxu0 %v272
    %675 = vmatprep.subr.mxu0 %v275
    %676 = vmatpush1.msra.mxu0 %v274
    %677 = vmatprep.subr.mxu0 %v277
    %678 = vmatpush1.msra.mxu0 %v276
    %679 = vmatprep.subr.mxu0 %v279
    %680 = vmatpush1.msra.mxu0 %v278
    %681 = vmatprep.subr.mxu0 %v281
    %682 = vmatpush1.msra.mxu0 %v280
    %683 = vmatprep.subr.mxu0 %v283
    %684 = vmatpush1.msra.mxu0 %v282
    %685 = vmatprep.subr.mxu0 %v285
    %686 = vmatpush1.msra.mxu0 %v284
    %687 = vmatprep.subr.mxu0 0.0
    %688 = vmatpush1.msra.mxu0 0.0
    %689 = vmatprep.subr.mxu0 0.0
    %690 = vmatpush1.msra.mxu0 0.0
    %691 = vmatprep.subr.mxu0 0.0
    %692 = vmatpush1.msra.mxu0 0.0
    %693 = vmatprep.subr.mxu0 0.0
    %694 = vmatpush1.msra.mxu0 0.0
    %695 = vmatprep.subr.mxu0 0.0
    %696 = vmatpush1.msra.mxu0 0.0
    %697 = vmatprep.subr.mxu0 0.0
    %698 = vmatpush1.msra.mxu0 0.0
    %699 = vmatprep.subr.mxu0 0.0
    %700 = vmatpush1.msra.mxu0 0.0
    %701 = vmatprep.subr.mxu0 0.0
    %702 = vmatpush1.msra.mxu0 0.0
    %703 = vmatprep.subr.mxu0 0.0
    %704 = vmatpush1.msra.mxu0 0.0
    %705 = vmatprep.subr.mxu0 0.0
    %706 = vmatpush1.msra.mxu0 0.0
    %707 = vmatprep.subr.mxu0 0.0
    %708 = vmatpush1.msra.mxu0 0.0
    %709 = vmatprep.subr.mxu0 0.0
    %710 = vmatpush1.msra.mxu0 0.0
    %711 = vmatprep.subr.mxu0 0.0
    %712 = vmatpush1.msra.mxu0 0.0
    %713 = vmatprep.subr.mxu0 0.0
    %714 = vmatpush1.msra.mxu0 0.0
    %715 = vmatprep.subr.mxu0 0.0
    %716 = vmatpush1.msra.mxu0 0.0
    %717 = vmatprep.subr.mxu0 0.0
    %718 = vmatpush1.msra.mxu0 0.0
    %719 = vmatprep.mubr.f32.mxu0 0.0
    %720 = vmatmul.mubr.f32.gmra.mrb[0].mxu0 %v647
    %v721 = vpop.f32.mrb[0].mxu0
    %v722 = vadd.f32 0.0, %v721
    %v723 = vpop.f32.mrb[0].mxu0
    %v724 = vadd.f32 0.0, %v723
    %725 = vdwg.mxu0
    %v726 = vadd.f32 %v653, %v722
    %v727 = vadd.f32 %v654, %v724
    %v728 = vmax.f32 %v726, 0.0
    %v729 = vxor.u32 %v727, 2147483648
    %v730 = vmul.f32 %v729, 1.442695
    %v731 = vpow.pop %v730
    %v732 = vadd.f32 %v731, 1.0
    %v733 = vrcp.pop %v732
    %v734 = vmul.f32 1.0, %v733
    %v735 = vmul.f32 %v734, %v647
    %v736 = vsub.f32 1.0, %v734
    %v737 = vmul.f32 %v736, %v728
    %v738 = vadd.f32 %v735, %v737
    %s739 = scalar_lea.vmem [#allocation12], 32
    %740 = vst [vmem:[%s739] sm:$0xff] %v738
    %s741 = smul.u32 5, 2
    %s742 = smul.addr %s741, 8
    %s743 = scalar_lea.vmem [#allocation2], %s742
    %v744 = vld [vmem:[%s743] sm:$0xff]
    %v745 = vld [vmem:[%s743 + $0x8] sm:$0xff]
    %746 = vmatprep.subr.mxu0 %v255
    %747 = vmatpush1.msra.mxu0 %v254
    %748 = vmatprep.subr.mxu0 %v257
    %749 = vmatpush1.msra.mxu0 %v256
    %750 = vmatprep.subr.mxu0 %v259
    %751 = vmatpush1.msra.mxu0 %v258
    %752 = vmatprep.subr.mxu0 %v261
    %753 = vmatpush1.msra.mxu0 %v260
    %754 = vmatprep.subr.mxu0 %v263
    %755 = vmatpush1.msra.mxu0 %v262
    %756 = vmatprep.subr.mxu0 %v265
    %757 = vmatpush1.msra.mxu0 %v264
    %758 = vmatprep.subr.mxu0 %v267
    %759 = vmatpush1.msra.mxu0 %v266
    %760 = vmatprep.subr.mxu0 %v269
    %761 = vmatpush1.msra.mxu0 %v268
    %762 = vmatprep.subr.mxu0 %v271
    %763 = vmatpush1.msra.mxu0 %v270
    %764 = vmatprep.subr.mxu0 %v273
    %765 = vmatpush1.msra.mxu0 %v272
    %766 = vmatprep.subr.mxu0 %v275
    %767 = vmatpush1.msra.mxu0 %v274
    %768 = vmatprep.subr.mxu0 %v277
    %769 = vmatpush1.msra.mxu0 %v276
    %770 = vmatprep.subr.mxu0 %v279
    %771 = vmatpush1.msra.mxu0 %v278
    %772 = vmatprep.subr.mxu0 %v281
    %773 = vmatpush1.msra.mxu0 %v280
    %774 = vmatprep.subr.mxu0 %v283
    %775 = vmatpush1.msra.mxu0 %v282
    %776 = vmatprep.subr.mxu0 %v285
    %777 = vmatpush1.msra.mxu0 %v284
    %778 = vmatprep.subr.mxu0 0.0
    %779 = vmatpush1.msra.mxu0 0.0
    %780 = vmatprep.subr.mxu0 0.0
    %781 = vmatpush1.msra.mxu0 0.0
    %782 = vmatprep.subr.mxu0 0.0
    %783 = vmatpush1.msra.mxu0 0.0
    %784 = vmatprep.subr.mxu0 0.0
    %785 = vmatpush1.msra.mxu0 0.0
    %786 = vmatprep.subr.mxu0 0.0
    %787 = vmatpush1.msra.mxu0 0.0
    %788 = vmatprep.subr.mxu0 0.0
    %789 = vmatpush1.msra.mxu0 0.0
    %790 = vmatprep.subr.mxu0 0.0
    %791 = vmatpush1.msra.mxu0 0.0
    %792 = vmatprep.subr.mxu0 0.0
    %793 = vmatpush1.msra.mxu0 0.0
    %794 = vmatprep.subr.mxu0 0.0
    %795 = vmatpush1.msra.mxu0 0.0
    %796 = vmatprep.subr.mxu0 0.0
    %797 = vmatpush1.msra.mxu0 0.0
    %798 = vmatprep.subr.mxu0 0.0
    %799 = vmatpush1.msra.mxu0 0.0
    %800 = vmatprep.subr.mxu0 0.0
    %801 = vmatpush1.msra.mxu0 0.0
    %802 = vmatprep.subr.mxu0 0.0
    %803 = vmatpush1.msra.mxu0 0.0
    %804 = vmatprep.subr.mxu0 0.0
    %805 = vmatpush1.msra.mxu0 0.0
    %806 = vmatprep.subr.mxu0 0.0
    %807 = vmatpush1.msra.mxu0 0.0
    %808 = vmatprep.subr.mxu0 0.0
    %809 = vmatpush1.msra.mxu0 0.0
    %810 = vmatprep.mubr.f32.mxu0 0.0
    %811 = vmatmul.mubr.f32.gmra.mrb[0].mxu0 %v738
    %v812 = vpop.f32.mrb[0].mxu0
    %v813 = vadd.f32 0.0, %v812
    %v814 = vpop.f32.mrb[0].mxu0
    %v815 = vadd.f32 0.0, %v814
    %816 = vdwg.mxu0
    %v817 = vadd.f32 %v744, %v813
    %v818 = vadd.f32 %v745, %v815
    %v819 = vmax.f32 %v817, 0.0
    %v820 = vxor.u32 %v818, 2147483648
    %v821 = vmul.f32 %v820, 1.442695
    %v822 = vpow.pop %v821
    %v823 = vadd.f32 %v822, 1.0
    %v824 = vrcp.pop %v823
    %v825 = vmul.f32 1.0, %v824
    %v826 = vmul.f32 %v825, %v738
    %v827 = vsub.f32 1.0, %v825
    %v828 = vmul.f32 %v827, %v819
    %v829 = vadd.f32 %v826, %v828
    %s830 = scalar_lea.vmem [#allocation12], 40
    %831 = vst [vmem:[%s830] sm:$0xff] %v829
    %s832 = smul.u32 6, 2
    %s833 = smul.addr %s832, 8
    %s834 = scalar_lea.vmem [#allocation2], %s833
    %v835 = vld [vmem:[%s834] sm:$0xff]
    %v836 = vld [vmem:[%s834 + $0x8] sm:$0xff]
    %837 = vmatprep.subr.mxu0 %v255
    %838 = vmatpush1.msra.mxu0 %v254
    %839 = vmatprep.subr.mxu0 %v257
    %840 = vmatpush1.msra.mxu0 %v256
    %841 = vmatprep.subr.mxu0 %v259
    %842 = vmatpush1.msra.mxu0 %v258
    %843 = vmatprep.subr.mxu0 %v261
    %844 = vmatpush1.msra.mxu0 %v260
    %845 = vmatprep.subr.mxu0 %v263
    %846 = vmatpush1.msra.mxu0 %v262
    %847 = vmatprep.subr.mxu0 %v265
    %848 = vmatpush1.msra.mxu0 %v264
    %849 = vmatprep.subr.mxu0 %v267
    %850 = vmatpush1.msra.mxu0 %v266
    %851 = vmatprep.subr.mxu0 %v269
    %852 = vmatpush1.msra.mxu0 %v268
    %853 = vmatprep.subr.mxu0 %v271
    %854 = vmatpush1.msra.mxu0 %v270
    %855 = vmatprep.subr.mxu0 %v273
    %856 = vmatpush1.msra.mxu0 %v272
    %857 = vmatprep.subr.mxu0 %v275
    %858 = vmatpush1.msra.mxu0 %v274
    %859 = vmatprep.subr.mxu0 %v277
    %860 = vmatpush1.msra.mxu0 %v276
    %861 = vmatprep.subr.mxu0 %v279
    %862 = vmatpush1.msra.mxu0 %v278
    %863 = vmatprep.subr.mxu0 %v281
    %864 = vmatpush1.msra.mxu0 %v280
    %865 = vmatprep.subr.mxu0 %v283
    %866 = vmatpush1.msra.mxu0 %v282
    %867 = vmatprep.subr.mxu0 %v285
    %868 = vmatpush1.msra.mxu0 %v284
    %869 = vmatprep.subr.mxu0 0.0
    %870 = vmatpush1.msra.mxu0 0.0
    %871 = vmatprep.subr.mxu0 0.0
    %872 = vmatpush1.msra.mxu0 0.0
    %873 = vmatprep.subr.mxu0 0.0
    %874 = vmatpush1.msra.mxu0 0.0
    %875 = vmatprep.subr.mxu0 0.0
    %876 = vmatpush1.msra.mxu0 0.0
    %877 = vmatprep.subr.mxu0 0.0
    %878 = vmatpush1.msra.mxu0 0.0
    %879 = vmatprep.subr.mxu0 0.0
    %880 = vmatpush1.msra.mxu0 0.0
    %881 = vmatprep.subr.mxu0 0.0
    %882 = vmatpush1.msra.mxu0 0.0
    %883 = vmatprep.subr.mxu0 0.0
    %884 = vmatpush1.msra.mxu0 0.0
    %885 = vmatprep.subr.mxu0 0.0
    %886 = vmatpush1.msra.mxu0 0.0
    %887 = vmatprep.subr.mxu0 0.0
    %888 = vmatpush1.msra.mxu0 0.0
    %889 = vmatprep.subr.mxu0 0.0
    %890 = vmatpush1.msra.mxu0 0.0
    %891 = vmatprep.subr.mxu0 0.0
    %892 = vmatpush1.msra.mxu0 0.0
    %893 = vmatprep.subr.mxu0 0.0
    %894 = vmatpush1.msra.mxu0 0.0
    %895 = vmatprep.subr.mxu0 0.0
    %896 = vmatpush1.msra.mxu0 0.0
    %897 = vmatprep.subr.mxu0 0.0
    %898 = vmatpush1.msra.mxu0 0.0
    %899 = vmatprep.subr.mxu0 0.0
    %900 = vmatpush1.msra.mxu0 0.0
    %901 = vmatprep.mubr.f32.mxu0 0.0
    %902 = vmatmul.mubr.f32.gmra.mrb[0].mxu0 %v829
    %v903 = vpop.f32.mrb[0].mxu0
    %v904 = vadd.f32 0.0, %v903
    %v905 = vpop.f32.mrb[0].mxu0
    %v906 = vadd.f32 0.0, %v905
    %907 = vdwg.mxu0
    %v908 = vadd.f32 %v835, %v904
    %v909 = vadd.f32 %v836, %v906
    %v910 = vmax.f32 %v908, 0.0
    %v911 = vxor.u32 %v909, 2147483648
    %v912 = vmul.f32 %v911, 1.442695
    %v913 = vpow.pop %v912
    %v914 = vadd.f32 %v913, 1.0
    %v915 = vrcp.pop %v914
    %v916 = vmul.f32 1.0, %v915
    %v917 = vmul.f32 %v916, %v829
    %v918 = vsub.f32 1.0, %v916
    %v919 = vmul.f32 %v918, %v910
    %v920 = vadd.f32 %v917, %v919
    %s921 = scalar_lea.vmem [#allocation12], 48
    %922 = vst [vmem:[%s921] sm:$0xff] %v920
    %s923 = smul.u32 7, 2
    %s924 = smul.addr %s923, 8
    %s925 = scalar_lea.vmem [#allocation2], %s924
    %v926 = vld [vmem:[%s925] sm:$0xff]
    %v927 = vld [vmem:[%s925 + $0x8] sm:$0xff]
    %928 = vmatprep.subr.mxu0 %v255
    %929 = vmatpush1.msra.mxu0 %v254
    %930 = vmatprep.subr.mxu0 %v257
    %931 = vmatpush1.msra.mxu0 %v256
    %932 = vmatprep.subr.mxu0 %v259
    %933 = vmatpush1.msra.mxu0 %v258
    %934 = vmatprep.subr.mxu0 %v261
    %935 = vmatpush1.msra.mxu0 %v260
    %936 = vmatprep.subr.mxu0 %v263
    %937 = vmatpush1.msra.mxu0 %v262
    %938 = vmatprep.subr.mxu0 %v265
    %939 = vmatpush1.msra.mxu0 %v264
    %940 = vmatprep.subr.mxu0 %v267
    %941 = vmatpush1.msra.mxu0 %v266
    %942 = vmatprep.subr.mxu0 %v269
    %943 = vmatpush1.msra.mxu0 %v268
    %944 = vmatprep.subr.mxu0 %v271
    %945 = vmatpush1.msra.mxu0 %v270
    %946 = vmatprep.subr.mxu0 %v273
    %947 = vmatpush1.msra.mxu0 %v272
    %948 = vmatprep.subr.mxu0 %v275
    %949 = vmatpush1.msra.mxu0 %v274
    %950 = vmatprep.subr.mxu0 %v277
    %951 = vmatpush1.msra.mxu0 %v276
    %952 = vmatprep.subr.mxu0 %v279
    %953 = vmatpush1.msra.mxu0 %v278
    %954 = vmatprep.subr.mxu0 %v281
    %955 = vmatpush1.msra.mxu0 %v280
    %956 = vmatprep.subr.mxu0 %v283
    %957 = vmatpush1.msra.mxu0 %v282
    %958 = vmatprep.subr.mxu0 %v285
    %959 = vmatpush1.msra.mxu0 %v284
    %960 = vmatprep.subr.mxu0 0.0
    %961 = vmatpush1.msra.mxu0 0.0
    %962 = vmatprep.subr.mxu0 0.0
    %963 = vmatpush1.msra.mxu0 0.0
    %964 = vmatprep.subr.mxu0 0.0
    %965 = vmatpush1.msra.mxu0 0.0
    %966 = vmatprep.subr.mxu0 0.0
    %967 = vmatpush1.msra.mxu0 0.0
    %968 = vmatprep.subr.mxu0 0.0
    %969 = vmatpush1.msra.mxu0 0.0
    %970 = vmatprep.subr.mxu0 0.0
    %971 = vmatpush1.msra.mxu0 0.0
    %972 = vmatprep.subr.mxu0 0.0
    %973 = vmatpush1.msra.mxu0 0.0
    %974 = vmatprep.subr.mxu0 0.0
    %975 = vmatpush1.msra.mxu0 0.0
    %976 = vmatprep.subr.mxu0 0.0
    %977 = vmatpush1.msra.mxu0 0.0
    %978 = vmatprep.subr.mxu0 0.0
    %979 = vmatpush1.msra.mxu0 0.0
    %980 = vmatprep.subr.mxu0 0.0
    %981 = vmatpush1.msra.mxu0 0.0
    %982 = vmatprep.subr.mxu0 0.0
    %983 = vmatpush1.msra.mxu0 0.0
    %984 = vmatprep.subr.mxu0 0.0
    %985 = vmatpush1.msra.mxu0 0.0
    %986 = vmatprep.subr.mxu0 0.0
    %987 = vmatpush1.msra.mxu0 0.0
    %988 = vmatprep.subr.mxu0 0.0
    %989 = vmatpush1.msra.mxu0 0.0
    %990 = vmatprep.subr.mxu0 0.0
    %991 = vmatpush1.msra.mxu0 0.0
    %992 = vmatprep.mubr.f32.mxu0 0.0
    %993 = vmatmul.mubr.f32.gmra.mrb[0].mxu0 %v920
    %v994 = vpop.f32.mrb[0].mxu0
    %v995 = vadd.f32 0.0, %v994
    %v996 = vpop.f32.mrb[0].mxu0
    %v997 = vadd.f32 0.0, %v996
    %998 = vdwg.mxu0
    %v999 = vadd.f32 %v926, %v995
    %v1000 = vadd.f32 %v927, %v997
    %v1001 = vmax.f32 %v999, 0.0
    %v1002 = vxor.u32 %v1000, 2147483648
    %v1003 = vmul.f32 %v1002, 1.442695
    %v1004 = vpow.pop %v1003
    %v1005 = vadd.f32 %v1004, 1.0
    %v1006 = vrcp.pop %v1005
    %v1007 = vmul.f32 1.0, %v1006
    %v1008 = vmul.f32 %v1007, %v920
    %v1009 = vsub.f32 1.0, %v1007
    %v1010 = vmul.f32 %v1009, %v1001
    %v1011 = vadd.f32 %v1008, %v1010
    %s1012 = scalar_lea.vmem [#allocation12], 56
    %1013 = vst [vmem:[%s1012] sm:$0xff] %v1011
    %1014 = vst [vmem:[#allocation3] sm:$0xff] %v1011
    // Predicated region
    $region38: #{tpu_custom_call.1} parent=1 // pred_check
      _
    $region39: #{tpu_custom_call.1} parent=1 // pred_check_branch
      %1016 = sbr.rel (0) target = $region41
    $region40: #{tpu_custom_call.1} parent=1 // pred_region
      %s1018 = ssub.s32 1024, 1024
      %1019 = vsyncadd [#allocation6], %s1018
      %s1020 = sshll.u32 [#allocation12], 4
      %s1021 = int_to_ptr.vmem [resolvable:$true] %s1020
      %1026 = dma.vmem_to_hbm [thread:$0]  %s1021, 1024, %s4, [#allocation6], 128, 128, 8
    $region41: #{tpu_custom_call.1} parent=1 // pred_fallthru
      _
    // Predicated region
    $region42: #{tpu_custom_call.1} parent=1 // pred_check
      _
    $region43: #{tpu_custom_call.1} parent=1 // pred_check_branch
      %1028 = sbr.rel (0) target = $region45
    $region44: #{tpu_custom_call.1} parent=1 // pred_region
      %1029 = dma.done [#allocation6], 1024
    $region45: #{tpu_custom_call.1} parent=1 // pred_fallthru
      _
    %1030 = vsyncpa [#allocation5], 1
    %1031 = vsyncpa [#allocation8], 1
    %1032 = vsyncpa [#allocation11], 1
    %1033 = vsyncpa [#allocation6], 1

</llo_original>
